<compile_context>
chip_gen: v5e
topology: v5e:2x2
jax: 0.10.0
libtpu: 0.0.40
codegen_flags: <defaults>
</compile_context>

<pallas_src>
import functools

import jax
import jax.numpy as jnp
import numpy as np
from jax.experimental import pallas as pl
from jax.experimental.pallas import tpu as pltpu


def _cdiv(a, b):
    return -(-a // b)


def _round_up(a, b):
    return _cdiv(a, b) * b


def _res_conv_critic_kernel(xa_ref, xb_ref, w1_ref, b1_ref, w2_ref, b2_ref,
                            w3_ref, b3_ref, ws_ref, bs_ref, o_ref, *, offsets):
    """Fused forward for one (batch, spatial-tile) grid step.

    xa_ref : (1, Cp, TS)       bf16 flat input, spatial tile t
    xb_ref : (1, Cp, HL)       bf16 halo sliver = head of spatial tile t+1
    w1,b1  : (Cp, Cp) bf16, (Cp, 1) f32         1x1 conv
    w2,b2  : (9, Cp, Cp) bf16, (Cp, 1) f32      3x3 conv, one (Cp,Cp) per tap
    w3,b3  : (Cout, Cp) bf16, (Cout, 1) f32     1x1 conv
    ws,bs  : (9, Cout, Cp) bf16, (Cout, 1) f32  skip 3x3 conv
    o_ref  : (1, Cout, TS) bf16 output tile (padded-frame flat spatial on lanes)
    """
    ts = o_ref.shape[2]
    cout = o_ref.shape[1]
    cp = b2_ref.shape[0]
    f32 = jnp.float32
    cdt = xa_ref.dtype                      # MXU operand dtype (bf16)

    # Tile t plus its right halo sliver; kept in bf16 so every matmul below
    # runs at the bf16 MXU rate (accumulation is f32).
    xw = jnp.concatenate([xa_ref[0], xb_ref[0]], axis=1)        # (Cp, TS+HL)

    # conv1 (1x1) + ReLU: once per pixel of the window, NOT once per tap.
    h1 = jnp.dot(w1_ref[...], xw, preferred_element_type=f32) + b1_ref[...]
    h1 = jnp.maximum(h1, 0.0).astype(cdt)                       # (Cp, TS+HL)

    # Both 3x3 convs as nine accumulating dots over statically shifted lane
    # windows (tap (kh,kw) <-> flat shift kh*Wp+kw); f32 accumulators.
    h2 = jnp.zeros((cp, ts), f32)
    skip = jnp.zeros((cout, ts), f32)
    for tap, k in enumerate(offsets):                           # unrolled (9)
        h2 = h2 + jnp.dot(w2_ref[tap], h1[:, k:k + ts],
                          preferred_element_type=f32)
        skip = skip + jnp.dot(ws_ref[tap], xw[:, k:k + ts],
                              preferred_element_type=f32)
    h2 = jnp.maximum(h2 + b2_ref[...], 0.0).astype(cdt)         # (Cp, TS)

    # conv3 (1x1) closes the seq branch; add biases and the skip branch.
    seq = jnp.dot(w3_ref[...], h2, preferred_element_type=f32) + b3_ref[...]
    skip = skip + bs_ref[...]

    o_ref[0] = jnp.maximum(seq + skip, 0.0).astype(o_ref.dtype)  # (Cout, TS)


def res_conv_critic_forward(x_nchw, params, *, tile_s=512,
                            transfer_dtype=jnp.bfloat16):
    """x_nchw: (N, Cin, H, W) f32 -> (N, Cout, H-2, W+1) f32 (NCHW)."""
    w1, b1, w2, b2, w3, b3, ws, bs = params            # PyTorch (O, I, kh, kw)
    N, Cin, H, W = x_nchw.shape
    Cout = ws.shape[0]
    Ho, Wo = H - 2, W + 1
    Wp = W + 3                                         # padded width
    Cp = _round_up(Cin, 8)                             # sublane-aligned channels
    dc = Cp - Cin
    f32 = jnp.float32

    # --- W padding: ReplicationPad2d((1,0)) then circular pad (1,1) ----------
    xpad = jnp.concatenate([x_nchw[:, :, :, :1], x_nchw], axis=3)               # W+1
    xpad = jnp.concatenate([xpad[:, :, :, -1:], xpad, xpad[:, :, :, :1]], axis=3)  # W+3

    # --- spatial tiling over the padded frame (Ho x Wp), flattened with row
    #     stride Wp; tap (kh,kw) becomes the static lane shift kh*Wp + kw -----
    halo = 2 * Wp + 2                                  # largest tap shift
    halo_lanes = _round_up(halo, 128)                  # halo sliver width
    l_need = Ho * Wp
    # Lane-dense tiles: multiple of 128 AND of halo_lanes so the halo sliver's
    # block index ((t+1)*tile_s/halo_lanes) is exact.
    tile_s = _round_up(max(tile_s, halo_lanes), halo_lanes)
    # Never wider than one image's flat extent (avoid pure-junk lanes).
    tile_s = min(tile_s, _round_up(l_need, halo_lanes))
    # v7x megacore: keep >= 2 "parallel" grid steps whenever feasible.
    if N * _cdiv(l_need, tile_s) < 2 and l_need > halo_lanes:
        tile_s = _round_up(_cdiv(l_need, 2), halo_lanes)
    num_t = _cdiv(l_need, tile_s)
    l_pad = num_t * tile_s
    s_in = l_pad + halo_lanes                          # last tile's halo stays in-bounds
    halo_ratio = tile_s // halo_lanes

    x_flat = xpad.reshape(N, Cin, H * Wp)
    x_flat = jnp.pad(x_flat, ((0, 0), (0, dc), (0, s_in - H * Wp)))
    x_flat = x_flat.astype(transfer_dtype)             # bf16 HBM slab == bf16 MXU operand

    # --- weights: zero-pad channels to Cp; 3x3 weights become one (O, I)
    #     matrix per tap, already in the MXU operand dtype.  Biases stay f32. -
    wdt = transfer_dtype
    w1m = jnp.pad(w1[:, :, 0, 0], ((0, dc), (0, dc))).astype(wdt)          # (Cp, Cp)
    w3m = jnp.pad(w3[:, :, 0, 0], ((0, 0), (0, dc))).astype(wdt)           # (Cout, Cp)
    w2m = jnp.pad(jnp.transpose(w2, (2, 3, 0, 1)),                         # (3,3,O,I)
                  ((0, 0), (0, 0), (0, dc), (0, dc))
                  ).reshape(9, Cp, Cp).astype(wdt)
    wsm = jnp.pad(jnp.transpose(ws, (2, 3, 0, 1)),
                  ((0, 0), (0, 0), (0, 0), (0, dc))
                  ).reshape(9, Cout, Cp).astype(wdt)
    b1m = jnp.pad(b1, (0, dc)).reshape(Cp, 1).astype(f32)
    b2m = jnp.pad(b2, (0, dc)).reshape(Cp, 1).astype(f32)
    b3m = b3.reshape(Cout, 1).astype(f32)
    bsm = bs.reshape(Cout, 1).astype(f32)

    offsets = tuple(kh * Wp + kw for kh in range(3) for kw in range(3))

    def bcast_spec(shape):
        # Constant-index weight blocks.  At production channel counts these
        # could additionally be single-buffered (pipeline_mode=pl.Buffered(1))
        # to save VMEM; irrelevant at the tiny weights used here.
        zero = (0,) * len(shape)
        return pl.BlockSpec(shape, lambda n, t, _z=zero: _z)

    itemsize = jnp.dtype(transfer_dtype).itemsize
    flops = 2 * N * l_pad * (Cp * Cp + 9 * Cp * Cp + Cp * Cout + 9 * Cp * Cout)
    bytes_accessed = (N * Cp * (l_pad + num_t * halo_lanes) * itemsize   # input + halo re-read
                      + N * Cout * l_pad * itemsize                      # bf16 output
                      + sum(int(a.size) * a.dtype.itemsize
                            for a in (w1m, b1m, w2m, b2m, w3m, b3m, wsm, bsm)))

    out_flat = pl.pallas_call(
        functools.partial(_res_conv_critic_kernel, offsets=offsets),
        out_shape=jax.ShapeDtypeStruct((N, Cout, l_pad), transfer_dtype),
        grid=(N, num_t),
        in_specs=[
            pl.BlockSpec((1, Cp, tile_s), lambda n, t: (n, 0, t)),        # tile t
            pl.BlockSpec((1, Cp, halo_lanes),                             # halo sliver
                         lambda n, t, _r=halo_ratio: (n, 0, (t + 1) * _r)),
            bcast_spec((Cp, Cp)), bcast_spec((Cp, 1)),
            bcast_spec((9, Cp, Cp)), bcast_spec((Cp, 1)),
            bcast_spec((Cout, Cp)), bcast_spec((Cout, 1)),
            bcast_spec((9, Cout, Cp)), bcast_spec((Cout, 1)),
        ],
        out_specs=pl.BlockSpec((1, Cout, tile_s), lambda n, t: (n, 0, t)),
        compiler_params=pltpu.CompilerParams(
            dimension_semantics=("parallel", "parallel"),
            # Few-MiB footprint even at tile_s=2048 with these channel counts;
            # 32 MiB is safe on every generation (v7x physical VMEM = 64 MiB).
            vmem_limit_bytes=32 * 1024 * 1024),
        cost_estimate=pl.CostEstimate(flops=int(flops), transcendentals=0,
                                      bytes_accessed=int(bytes_accessed)),
    )(x_flat, x_flat, w1m, b1m, w2m, b2m, w3m, b3m, wsm, bsm)

    # (N, Cout, l_pad) bf16 -> NCHW f32 (N, Cout, Ho, Wo): drop the 2 junk
    # columns per padded-frame row, then upcast in the wrapper.
    out = out_flat[:, :, :l_need].reshape(N, Cout, Ho, Wp)[:, :, :, :Wo]
    return out.astype(jnp.float32)


def _ref_forward(x, params):
    """Pure-JAX reference mirroring the PyTorch module (NCHW, f32)."""
    w1, b1, w2, b2, w3, b3, ws, bs = params
    dn = ('NCHW', 'OIHW', 'NCHW')

    def conv(t, w):
        return jax.lax.conv_general_dilated(t, w, (1, 1), 'VALID',
                                            dimension_numbers=dn)

    def addb(t, b):
        return t + b.reshape(1, -1, 1, 1)

    def pad_w(t):  # ReplicationPad2d((1,0)) then circular pad (1,1) on W
        t = jnp.concatenate([t[:, :, :, :1], t], axis=3)
        return jnp.concatenate([t[:, :, :, -1:], t, t[:, :, :, :1]], axis=3)

    h = jax.nn.relu(addb(conv(x, w1), b1))
    h = jax.nn.relu(addb(conv(pad_w(h), w2), b2))
    seq = addb(conv(h, w3), b3)
    skip = addb(conv(pad_w(x), ws), bs)
    return jax.nn.relu(seq + skip)


def _init_params(key, inchan, outchan):
    ks = jax.random.split(key, 8)
    sc = 0.1
    w1 = sc * jax.random.normal(ks[0], (inchan, inchan, 1, 1), jnp.float32)
    b1 = sc * jax.random.normal(ks[1], (inchan,), jnp.float32)
    w2 = sc * jax.random.normal(ks[2], (inchan, inchan, 3, 3), jnp.float32)
    b2 = sc * jax.random.normal(ks[3], (inchan,), jnp.float32)
    w3 = sc * jax.random.normal(ks[4], (outchan, inchan, 1, 1), jnp.float32)
    b3 = sc * jax.random.normal(ks[5], (outchan,), jnp.float32)
    ws = sc * jax.random.normal(ks[6], (outchan, inchan, 3, 3), jnp.float32)
    bs = sc * jax.random.normal(ks[7], (outchan,), jnp.float32)
    return (w1, b1, w2, b2, w3, b3, ws, bs)


if __name__ == "__main__":
    key = jax.random.PRNGKey(0)
    k_x, k_p = jax.random.split(key)

    N, inchan, outchan, H, W = 2, 4, 8, 16, 16
    x = jax.random.normal(k_x, (N, inchan, H, W), jnp.float32)
    params = _init_params(k_p, inchan, outchan)

    out = jax.block_until_ready(jax.jit(res_conv_critic_forward)(x, params))
    ref = jax.block_until_ready(_ref_forward(x, params))

    assert out.shape == (N, outchan, H - 2, W + 1), out.shape
    # Activations, weights, intermediates and the output all travel in bf16
    # (accumulation is f32), hence the loosened tolerance.
    assert np.allclose(np.asarray(out), np.asarray(ref), atol=4e-2, rtol=4e-2), (
        float(np.max(np.abs(np.asarray(out) - np.asarray(ref)))))
    print("KERNEL_OK")
</pallas_src>

<mosaic_0001>
module attributes {stable_mosaic.version = 11 : i64} {
  func.func @_res_conv_critic_kernel(%arg0: i32, %arg1: i32, %arg2: memref<1x8x384xbf16, #tpu.memory_space<vmem>>, %arg3: memref<1x8x128xbf16, #tpu.memory_space<vmem>>, %arg4: memref<8x8xbf16, #tpu.memory_space<vmem>>, %arg5: memref<8x1xf32, #tpu.memory_space<vmem>>, %arg6: memref<9x8x8xbf16, #tpu.memory_space<vmem>>, %arg7: memref<8x1xf32, #tpu.memory_space<vmem>>, %arg8: memref<8x8xbf16, #tpu.memory_space<vmem>>, %arg9: memref<8x1xf32, #tpu.memory_space<vmem>>, %arg10: memref<9x8x8xbf16, #tpu.memory_space<vmem>>, %arg11: memref<8x1xf32, #tpu.memory_space<vmem>>, %arg12: memref<1x8x384xbf16, #tpu.memory_space<vmem>>) attributes {dimension_semantics = [#tpu.dimension_semantics<parallel>, #tpu.dimension_semantics<parallel>], iteration_bounds = array<i64: 2, 1>, scalar_prefetch = 0 : i64, scratch_operands = 0 : i64, tpu.core_type = #tpu.core_type<tc>, window_params = [{transform_indices = @transform_0, window_bounds = array<i64: 1, 8, 384>}, {transform_indices = @transform_1, window_bounds = array<i64: 1, 8, 128>}, {pipeline_mode = #tpu.pipeline_mode<synchronous>, transform_indices = @transform_2, window_bounds = array<i64: 8, 8>}, {pipeline_mode = #tpu.pipeline_mode<synchronous>, transform_indices = @transform_3, window_bounds = array<i64: 8, 1>}, {pipeline_mode = #tpu.pipeline_mode<synchronous>, transform_indices = @transform_4, window_bounds = array<i64: 9, 8, 8>}, {pipeline_mode = #tpu.pipeline_mode<synchronous>, transform_indices = @transform_5, window_bounds = array<i64: 8, 1>}, {pipeline_mode = #tpu.pipeline_mode<synchronous>, transform_indices = @transform_6, window_bounds = array<i64: 8, 8>}, {pipeline_mode = #tpu.pipeline_mode<synchronous>, transform_indices = @transform_7, window_bounds = array<i64: 8, 1>}, {pipeline_mode = #tpu.pipeline_mode<synchronous>, transform_indices = @transform_8, window_bounds = array<i64: 9, 8, 8>}, {pipeline_mode = #tpu.pipeline_mode<synchronous>, transform_indices = @transform_9, window_bounds = array<i64: 8, 1>}, {transform_indices = @transform_10, window_bounds = array<i64: 1, 8, 384>}]} {
    %c0 = arith.constant 0 : index
    %c0_0 = arith.constant 0 : index
    %c0_1 = arith.constant 0 : index
    %0 = vector.load %arg2[%c0, %c0_0, %c0_1] : memref<1x8x384xbf16, #tpu.memory_space<vmem>>, vector<1x8x384xbf16>
    %1 = vector.shape_cast %0 : vector<1x8x384xbf16> to vector<8x384xbf16>
    %c0_2 = arith.constant 0 : index
    %c0_3 = arith.constant 0 : index
    %c0_4 = arith.constant 0 : index
    %2 = vector.load %arg3[%c0_2, %c0_3, %c0_4] : memref<1x8x128xbf16, #tpu.memory_space<vmem>>, vector<1x8x128xbf16>
    %3 = vector.shape_cast %2 : vector<1x8x128xbf16> to vector<8x128xbf16>
    %4 = tpu.concatenate %1, %3 in 1 : vector<8x384xbf16>, vector<8x128xbf16> -> vector<8x512xbf16>
    %c0_5 = arith.constant 0 : index
    %c0_6 = arith.constant 0 : index
    %5 = vector.load %arg4[%c0_5, %c0_6] : memref<8x8xbf16, #tpu.memory_space<vmem>>, vector<8x8xbf16>
    %cst = arith.constant dense<0.000000e+00> : vector<8x512xf32>
    %6 = tpu.matmul %5, %4, %cst {dimension_numbers = #tpu.dot_dimension_numbers<[1], [0], [0], [1], [0, 0, 1, 1], [], []>} : vector<8x8xbf16>, vector<8x512xbf16>, vector<8x512xf32> -> vector<8x512xf32>
    %c0_7 = arith.constant 0 : index
    %c0_8 = arith.constant 0 : index
    %7 = vector.load %arg5[%c0_7, %c0_8] : memref<8x1xf32, #tpu.memory_space<vmem>>, vector<8x1xf32>
    %8 = vector.broadcast %7 : vector<8x1xf32> to vector<8x512xf32>
    %9 = arith.addf %6, %8 : vector<8x512xf32>
    %cst_9 = arith.constant 0.000000e+00 : f32
    %10 = vector.broadcast %cst_9 : f32 to vector<8x512xf32>
    %11 = arith.maximumf %9, %10 : vector<8x512xf32>
    %12 = arith.truncf %11 : vector<8x512xf32> to vector<8x512xbf16>
    %cst_10 = arith.constant 0.000000e+00 : f32
    %13 = vector.broadcast %cst_10 : f32 to vector<8x384xf32>
    %cst_11 = arith.constant 0.000000e+00 : f32
    %14 = vector.broadcast %cst_11 : f32 to vector<8x384xf32>
    %c0_12 = arith.constant 0 : index
    %c0_13 = arith.constant 0 : index
    %c0_14 = arith.constant 0 : index
    %15 = vector.load %arg6[%c0_12, %c0_13, %c0_14] : memref<9x8x8xbf16, #tpu.memory_space<vmem>>, vector<1x8x8xbf16>
    %16 = vector.shape_cast %15 : vector<1x8x8xbf16> to vector<8x8xbf16>
    %17 = vector.extract_strided_slice %12 {offsets = [0, 0], sizes = [8, 384], strides = [1, 1]} : vector<8x512xbf16> to vector<8x384xbf16>
    %cst_15 = arith.constant dense<0.000000e+00> : vector<8x384xf32>
    %18 = tpu.matmul %16, %17, %cst_15 {dimension_numbers = #tpu.dot_dimension_numbers<[1], [0], [0], [1], [0, 0, 1, 1], [], []>} : vector<8x8xbf16>, vector<8x384xbf16>, vector<8x384xf32> -> vector<8x384xf32>
    %19 = arith.addf %13, %18 : vector<8x384xf32>
    %c0_16 = arith.constant 0 : index
    %c0_17 = arith.constant 0 : index
    %c0_18 = arith.constant 0 : index
    %20 = vector.load %arg10[%c0_16, %c0_17, %c0_18] : memref<9x8x8xbf16, #tpu.memory_space<vmem>>, vector<1x8x8xbf16>
    %21 = vector.shape_cast %20 : vector<1x8x8xbf16> to vector<8x8xbf16>
    %22 = vector.extract_strided_slice %4 {offsets = [0, 0], sizes = [8, 384], strides = [1, 1]} : vector<8x512xbf16> to vector<8x384xbf16>
    %cst_19 = arith.constant dense<0.000000e+00> : vector<8x384xf32>
    %23 = tpu.matmul %21, %22, %cst_19 {dimension_numbers = #tpu.dot_dimension_numbers<[1], [0], [0], [1], [0, 0, 1, 1], [], []>} : vector<8x8xbf16>, vector<8x384xbf16>, vector<8x384xf32> -> vector<8x384xf32>
    %24 = arith.addf %14, %23 : vector<8x384xf32>
    %c1 = arith.constant 1 : index
    %c0_20 = arith.constant 0 : index
    %c0_21 = arith.constant 0 : index
    %25 = vector.load %arg6[%c1, %c0_20, %c0_21] : memref<9x8x8xbf16, #tpu.memory_space<vmem>>, vector<1x8x8xbf16>
    %26 = vector.shape_cast %25 : vector<1x8x8xbf16> to vector<8x8xbf16>
    %27 = vector.extract_strided_slice %12 {offsets = [0, 1], sizes = [8, 384], strides = [1, 1]} : vector<8x512xbf16> to vector<8x384xbf16>
    %cst_22 = arith.constant dense<0.000000e+00> : vector<8x384xf32>
    %28 = tpu.matmul %26, %27, %cst_22 {dimension_numbers = #tpu.dot_dimension_numbers<[1], [0], [0], [1], [0, 0, 1, 1], [], []>} : vector<8x8xbf16>, vector<8x384xbf16>, vector<8x384xf32> -> vector<8x384xf32>
    %29 = arith.addf %19, %28 : vector<8x384xf32>
    %c1_23 = arith.constant 1 : index
    %c0_24 = arith.constant 0 : index
    %c0_25 = arith.constant 0 : index
    %30 = vector.load %arg10[%c1_23, %c0_24, %c0_25] : memref<9x8x8xbf16, #tpu.memory_space<vmem>>, vector<1x8x8xbf16>
    %31 = vector.shape_cast %30 : vector<1x8x8xbf16> to vector<8x8xbf16>
    %32 = vector.extract_strided_slice %4 {offsets = [0, 1], sizes = [8, 384], strides = [1, 1]} : vector<8x512xbf16> to vector<8x384xbf16>
    %cst_26 = arith.constant dense<0.000000e+00> : vector<8x384xf32>
    %33 = tpu.matmul %31, %32, %cst_26 {dimension_numbers = #tpu.dot_dimension_numbers<[1], [0], [0], [1], [0, 0, 1, 1], [], []>} : vector<8x8xbf16>, vector<8x384xbf16>, vector<8x384xf32> -> vector<8x384xf32>
    %34 = arith.addf %24, %33 : vector<8x384xf32>
    %c2 = arith.constant 2 : index
    %c0_27 = arith.constant 0 : index
    %c0_28 = arith.constant 0 : index
    %35 = vector.load %arg6[%c2, %c0_27, %c0_28] : memref<9x8x8xbf16, #tpu.memory_space<vmem>>, vector<1x8x8xbf16>
    %36 = vector.shape_cast %35 : vector<1x8x8xbf16> to vector<8x8xbf16>
    %37 = vector.extract_strided_slice %12 {offsets = [0, 2], sizes = [8, 384], strides = [1, 1]} : vector<8x512xbf16> to vector<8x384xbf16>
    %cst_29 = arith.constant dense<0.000000e+00> : vector<8x384xf32>
    %38 = tpu.matmul %36, %37, %cst_29 {dimension_numbers = #tpu.dot_dimension_numbers<[1], [0], [0], [1], [0, 0, 1, 1], [], []>} : vector<8x8xbf16>, vector<8x384xbf16>, vector<8x384xf32> -> vector<8x384xf32>
    %39 = arith.addf %29, %38 : vector<8x384xf32>
    %c2_30 = arith.constant 2 : index
    %c0_31 = arith.constant 0 : index
    %c0_32 = arith.constant 0 : index
    %40 = vector.load %arg10[%c2_30, %c0_31, %c0_32] : memref<9x8x8xbf16, #tpu.memory_space<vmem>>, vector<1x8x8xbf16>
    %41 = vector.shape_cast %40 : vector<1x8x8xbf16> to vector<8x8xbf16>
    %42 = vector.extract_strided_slice %4 {offsets = [0, 2], sizes = [8, 384], strides = [1, 1]} : vector<8x512xbf16> to vector<8x384xbf16>
    %cst_33 = arith.constant dense<0.000000e+00> : vector<8x384xf32>
    %43 = tpu.matmul %41, %42, %cst_33 {dimension_numbers = #tpu.dot_dimension_numbers<[1], [0], [0], [1], [0, 0, 1, 1], [], []>} : vector<8x8xbf16>, vector<8x384xbf16>, vector<8x384xf32> -> vector<8x384xf32>
    %44 = arith.addf %34, %43 : vector<8x384xf32>
    %c3 = arith.constant 3 : index
    %c0_34 = arith.constant 0 : index
    %c0_35 = arith.constant 0 : index
    %45 = vector.load %arg6[%c3, %c0_34, %c0_35] : memref<9x8x8xbf16, #tpu.memory_space<vmem>>, vector<1x8x8xbf16>
    %46 = vector.shape_cast %45 : vector<1x8x8xbf16> to vector<8x8xbf16>
    %47 = vector.extract_strided_slice %12 {offsets = [0, 19], sizes = [8, 384], strides = [1, 1]} : vector<8x512xbf16> to vector<8x384xbf16>
    %cst_36 = arith.constant dense<0.000000e+00> : vector<8x384xf32>
    %48 = tpu.matmul %46, %47, %cst_36 {dimension_numbers = #tpu.dot_dimension_numbers<[1], [0], [0], [1], [0, 0, 1, 1], [], []>} : vector<8x8xbf16>, vector<8x384xbf16>, vector<8x384xf32> -> vector<8x384xf32>
    %49 = arith.addf %39, %48 : vector<8x384xf32>
    %c3_37 = arith.constant 3 : index
    %c0_38 = arith.constant 0 : index
    %c0_39 = arith.constant 0 : index
    %50 = vector.load %arg10[%c3_37, %c0_38, %c0_39] : memref<9x8x8xbf16, #tpu.memory_space<vmem>>, vector<1x8x8xbf16>
    %51 = vector.shape_cast %50 : vector<1x8x8xbf16> to vector<8x8xbf16>
    %52 = vector.extract_strided_slice %4 {offsets = [0, 19], sizes = [8, 384], strides = [1, 1]} : vector<8x512xbf16> to vector<8x384xbf16>
    %cst_40 = arith.constant dense<0.000000e+00> : vector<8x384xf32>
    %53 = tpu.matmul %51, %52, %cst_40 {dimension_numbers = #tpu.dot_dimension_numbers<[1], [0], [0], [1], [0, 0, 1, 1], [], []>} : vector<8x8xbf16>, vector<8x384xbf16>, vector<8x384xf32> -> vector<8x384xf32>
    %54 = arith.addf %44, %53 : vector<8x384xf32>
    %c4 = arith.constant 4 : index
    %c0_41 = arith.constant 0 : index
    %c0_42 = arith.constant 0 : index
    %55 = vector.load %arg6[%c4, %c0_41, %c0_42] : memref<9x8x8xbf16, #tpu.memory_space<vmem>>, vector<1x8x8xbf16>
    %56 = vector.shape_cast %55 : vector<1x8x8xbf16> to vector<8x8xbf16>
    %57 = vector.extract_strided_slice %12 {offsets = [0, 20], sizes = [8, 384], strides = [1, 1]} : vector<8x512xbf16> to vector<8x384xbf16>
    %cst_43 = arith.constant dense<0.000000e+00> : vector<8x384xf32>
    %58 = tpu.matmul %56, %57, %cst_43 {dimension_numbers = #tpu.dot_dimension_numbers<[1], [0], [0], [1], [0, 0, 1, 1], [], []>} : vector<8x8xbf16>, vector<8x384xbf16>, vector<8x384xf32> -> vector<8x384xf32>
    %59 = arith.addf %49, %58 : vector<8x384xf32>
    %c4_44 = arith.constant 4 : index
    %c0_45 = arith.constant 0 : index
    %c0_46 = arith.constant 0 : index
    %60 = vector.load %arg10[%c4_44, %c0_45, %c0_46] : memref<9x8x8xbf16, #tpu.memory_space<vmem>>, vector<1x8x8xbf16>
    %61 = vector.shape_cast %60 : vector<1x8x8xbf16> to vector<8x8xbf16>
    %62 = vector.extract_strided_slice %4 {offsets = [0, 20], sizes = [8, 384], strides = [1, 1]} : vector<8x512xbf16> to vector<8x384xbf16>
    %cst_47 = arith.constant dense<0.000000e+00> : vector<8x384xf32>
    %63 = tpu.matmul %61, %62, %cst_47 {dimension_numbers = #tpu.dot_dimension_numbers<[1], [0], [0], [1], [0, 0, 1, 1], [], []>} : vector<8x8xbf16>, vector<8x384xbf16>, vector<8x384xf32> -> vector<8x384xf32>
    %64 = arith.addf %54, %63 : vector<8x384xf32>
    %c5 = arith.constant 5 : index
    %c0_48 = arith.constant 0 : index
    %c0_49 = arith.constant 0 : index
    %65 = vector.load %arg6[%c5, %c0_48, %c0_49] : memref<9x8x8xbf16, #tpu.memory_space<vmem>>, vector<1x8x8xbf16>
    %66 = vector.shape_cast %65 : vector<1x8x8xbf16> to vector<8x8xbf16>
    %67 = vector.extract_strided_slice %12 {offsets = [0, 21], sizes = [8, 384], strides = [1, 1]} : vector<8x512xbf16> to vector<8x384xbf16>
    %cst_50 = arith.constant dense<0.000000e+00> : vector<8x384xf32>
    %68 = tpu.matmul %66, %67, %cst_50 {dimension_numbers = #tpu.dot_dimension_numbers<[1], [0], [0], [1], [0, 0, 1, 1], [], []>} : vector<8x8xbf16>, vector<8x384xbf16>, vector<8x384xf32> -> vector<8x384xf32>
    %69 = arith.addf %59, %68 : vector<8x384xf32>
    %c5_51 = arith.constant 5 : index
    %c0_52 = arith.constant 0 : index
    %c0_53 = arith.constant 0 : index
    %70 = vector.load %arg10[%c5_51, %c0_52, %c0_53] : memref<9x8x8xbf16, #tpu.memory_space<vmem>>, vector<1x8x8xbf16>
    %71 = vector.shape_cast %70 : vector<1x8x8xbf16> to vector<8x8xbf16>
    %72 = vector.extract_strided_slice %4 {offsets = [0, 21], sizes = [8, 384], strides = [1, 1]} : vector<8x512xbf16> to vector<8x384xbf16>
    %cst_54 = arith.constant dense<0.000000e+00> : vector<8x384xf32>
    %73 = tpu.matmul %71, %72, %cst_54 {dimension_numbers = #tpu.dot_dimension_numbers<[1], [0], [0], [1], [0, 0, 1, 1], [], []>} : vector<8x8xbf16>, vector<8x384xbf16>, vector<8x384xf32> -> vector<8x384xf32>
    %74 = arith.addf %64, %73 : vector<8x384xf32>
    %c6 = arith.constant 6 : index
    %c0_55 = arith.constant 0 : index
    %c0_56 = arith.constant 0 : index
    %75 = vector.load %arg6[%c6, %c0_55, %c0_56] : memref<9x8x8xbf16, #tpu.memory_space<vmem>>, vector<1x8x8xbf16>
    %76 = vector.shape_cast %75 : vector<1x8x8xbf16> to vector<8x8xbf16>
    %77 = vector.extract_strided_slice %12 {offsets = [0, 38], sizes = [8, 384], strides = [1, 1]} : vector<8x512xbf16> to vector<8x384xbf16>
    %cst_57 = arith.constant dense<0.000000e+00> : vector<8x384xf32>
    %78 = tpu.matmul %76, %77, %cst_57 {dimension_numbers = #tpu.dot_dimension_numbers<[1], [0], [0], [1], [0, 0, 1, 1], [], []>} : vector<8x8xbf16>, vector<8x384xbf16>, vector<8x384xf32> -> vector<8x384xf32>
    %79 = arith.addf %69, %78 : vector<8x384xf32>
    %c6_58 = arith.constant 6 : index
    %c0_59 = arith.constant 0 : index
    %c0_60 = arith.constant 0 : index
    %80 = vector.load %arg10[%c6_58, %c0_59, %c0_60] : memref<9x8x8xbf16, #tpu.memory_space<vmem>>, vector<1x8x8xbf16>
    %81 = vector.shape_cast %80 : vector<1x8x8xbf16> to vector<8x8xbf16>
    %82 = vector.extract_strided_slice %4 {offsets = [0, 38], sizes = [8, 384], strides = [1, 1]} : vector<8x512xbf16> to vector<8x384xbf16>
    %cst_61 = arith.constant dense<0.000000e+00> : vector<8x384xf32>
    %83 = tpu.matmul %81, %82, %cst_61 {dimension_numbers = #tpu.dot_dimension_numbers<[1], [0], [0], [1], [0, 0, 1, 1], [], []>} : vector<8x8xbf16>, vector<8x384xbf16>, vector<8x384xf32> -> vector<8x384xf32>
    %84 = arith.addf %74, %83 : vector<8x384xf32>
    %c7 = arith.constant 7 : index
    %c0_62 = arith.constant 0 : index
    %c0_63 = arith.constant 0 : index
    %85 = vector.load %arg6[%c7, %c0_62, %c0_63] : memref<9x8x8xbf16, #tpu.memory_space<vmem>>, vector<1x8x8xbf16>
    %86 = vector.shape_cast %85 : vector<1x8x8xbf16> to vector<8x8xbf16>
    %87 = vector.extract_strided_slice %12 {offsets = [0, 39], sizes = [8, 384], strides = [1, 1]} : vector<8x512xbf16> to vector<8x384xbf16>
    %cst_64 = arith.constant dense<0.000000e+00> : vector<8x384xf32>
    %88 = tpu.matmul %86, %87, %cst_64 {dimension_numbers = #tpu.dot_dimension_numbers<[1], [0], [0], [1], [0, 0, 1, 1], [], []>} : vector<8x8xbf16>, vector<8x384xbf16>, vector<8x384xf32> -> vector<8x384xf32>
    %89 = arith.addf %79, %88 : vector<8x384xf32>
    %c7_65 = arith.constant 7 : index
    %c0_66 = arith.constant 0 : index
    %c0_67 = arith.constant 0 : index
    %90 = vector.load %arg10[%c7_65, %c0_66, %c0_67] : memref<9x8x8xbf16, #tpu.memory_space<vmem>>, vector<1x8x8xbf16>
    %91 = vector.shape_cast %90 : vector<1x8x8xbf16> to vector<8x8xbf16>
    %92 = vector.extract_strided_slice %4 {offsets = [0, 39], sizes = [8, 384], strides = [1, 1]} : vector<8x512xbf16> to vector<8x384xbf16>
    %cst_68 = arith.constant dense<0.000000e+00> : vector<8x384xf32>
    %93 = tpu.matmul %91, %92, %cst_68 {dimension_numbers = #tpu.dot_dimension_numbers<[1], [0], [0], [1], [0, 0, 1, 1], [], []>} : vector<8x8xbf16>, vector<8x384xbf16>, vector<8x384xf32> -> vector<8x384xf32>
    %94 = arith.addf %84, %93 : vector<8x384xf32>
    %c8 = arith.constant 8 : index
    %c0_69 = arith.constant 0 : index
    %c0_70 = arith.constant 0 : index
    %95 = vector.load %arg6[%c8, %c0_69, %c0_70] : memref<9x8x8xbf16, #tpu.memory_space<vmem>>, vector<1x8x8xbf16>
    %96 = vector.shape_cast %95 : vector<1x8x8xbf16> to vector<8x8xbf16>
    %97 = vector.extract_strided_slice %12 {offsets = [0, 40], sizes = [8, 384], strides = [1, 1]} : vector<8x512xbf16> to vector<8x384xbf16>
    %cst_71 = arith.constant dense<0.000000e+00> : vector<8x384xf32>
    %98 = tpu.matmul %96, %97, %cst_71 {dimension_numbers = #tpu.dot_dimension_numbers<[1], [0], [0], [1], [0, 0, 1, 1], [], []>} : vector<8x8xbf16>, vector<8x384xbf16>, vector<8x384xf32> -> vector<8x384xf32>
    %99 = arith.addf %89, %98 : vector<8x384xf32>
    %c8_72 = arith.constant 8 : index
    %c0_73 = arith.constant 0 : index
    %c0_74 = arith.constant 0 : index
    %100 = vector.load %arg10[%c8_72, %c0_73, %c0_74] : memref<9x8x8xbf16, #tpu.memory_space<vmem>>, vector<1x8x8xbf16>
    %101 = vector.shape_cast %100 : vector<1x8x8xbf16> to vector<8x8xbf16>
    %102 = vector.extract_strided_slice %4 {offsets = [0, 40], sizes = [8, 384], strides = [1, 1]} : vector<8x512xbf16> to vector<8x384xbf16>
    %cst_75 = arith.constant dense<0.000000e+00> : vector<8x384xf32>
    %103 = tpu.matmul %101, %102, %cst_75 {dimension_numbers = #tpu.dot_dimension_numbers<[1], [0], [0], [1], [0, 0, 1, 1], [], []>} : vector<8x8xbf16>, vector<8x384xbf16>, vector<8x384xf32> -> vector<8x384xf32>
    %104 = arith.addf %94, %103 : vector<8x384xf32>
    %c0_76 = arith.constant 0 : index
    %c0_77 = arith.constant 0 : index
    %105 = vector.load %arg7[%c0_76, %c0_77] : memref<8x1xf32, #tpu.memory_space<vmem>>, vector<8x1xf32>
    %106 = vector.broadcast %105 : vector<8x1xf32> to vector<8x384xf32>
    %107 = arith.addf %99, %106 : vector<8x384xf32>
    %cst_78 = arith.constant 0.000000e+00 : f32
    %108 = vector.broadcast %cst_78 : f32 to vector<8x384xf32>
    %109 = arith.maximumf %107, %108 : vector<8x384xf32>
    %110 = arith.truncf %109 : vector<8x384xf32> to vector<8x384xbf16>
    %c0_79 = arith.constant 0 : index
    %c0_80 = arith.constant 0 : index
    %111 = vector.load %arg8[%c0_79, %c0_80] : memref<8x8xbf16, #tpu.memory_space<vmem>>, vector<8x8xbf16>
    %cst_81 = arith.constant dense<0.000000e+00> : vector<8x384xf32>
    %112 = tpu.matmul %111, %110, %cst_81 {dimension_numbers = #tpu.dot_dimension_numbers<[1], [0], [0], [1], [0, 0, 1, 1], [], []>} : vector<8x8xbf16>, vector<8x384xbf16>, vector<8x384xf32> -> vector<8x384xf32>
    %c0_82 = arith.constant 0 : index
    %c0_83 = arith.constant 0 : index
    %113 = vector.load %arg9[%c0_82, %c0_83] : memref<8x1xf32, #tpu.memory_space<vmem>>, vector<8x1xf32>
    %114 = vector.broadcast %113 : vector<8x1xf32> to vector<8x384xf32>
    %115 = arith.addf %112, %114 : vector<8x384xf32>
    %c0_84 = arith.constant 0 : index
    %c0_85 = arith.constant 0 : index
    %116 = vector.load %arg11[%c0_84, %c0_85] : memref<8x1xf32, #tpu.memory_space<vmem>>, vector<8x1xf32>
    %117 = vector.broadcast %116 : vector<8x1xf32> to vector<8x384xf32>
    %118 = arith.addf %104, %117 : vector<8x384xf32>
    %119 = arith.addf %115, %118 : vector<8x384xf32>
    %cst_86 = arith.constant 0.000000e+00 : f32
    %120 = vector.broadcast %cst_86 : f32 to vector<8x384xf32>
    %121 = arith.maximumf %119, %120 : vector<8x384xf32>
    %122 = arith.truncf %121 : vector<8x384xf32> to vector<8x384xbf16>
    %c0_87 = arith.constant 0 : index
    %c0_88 = arith.constant 0 : index
    %c0_89 = arith.constant 0 : index
    %123 = vector.load %arg12[%c0_87, %c0_88, %c0_89] : memref<1x8x384xbf16, #tpu.memory_space<vmem>>, vector<1x8x384xbf16>
    %124 = vector.shape_cast %123 : vector<1x8x384xbf16> to vector<8x384xbf16>
    %125 = vector.shape_cast %122 : vector<8x384xbf16> to vector<1x8x384xbf16>
    tpu.vector_store %arg12[%c0_87, %c0_88, %c0_89], %125 {strides = array<i32>} : memref<1x8x384xbf16, #tpu.memory_space<vmem>>, vector<1x8x384xbf16>,
    return
  }
  func.func @transform_0(%arg0: i32, %arg1: i32) -> (i32, i32, i32) {
    %c0_i32 = arith.constant 0 : i32
    %c0_i32_0 = arith.constant 0 : i32
    return %arg0, %c0_i32, %arg1 : i32, i32, i32
  }
  func.func @transform_1(%arg0: i32, %arg1: i32) -> (i32, i32, i32) {
    %c1_i32 = arith.constant 1 : i32
    %0 = arith.addi %arg1, %c1_i32 : i32
    %c3_i32 = arith.constant 3 : i32
    %1 = arith.muli %0, %c3_i32 : i32
    %c0_i32 = arith.constant 0 : i32
    %c0_i32_0 = arith.constant 0 : i32
    return %arg0, %c0_i32, %1 : i32, i32, i32
  }
  func.func @transform_2(%arg0: i32, %arg1: i32) -> (i32, i32) {
    %c0_i32 = arith.constant 0 : i32
    %c0_i32_0 = arith.constant 0 : i32
    %c0_i32_1 = arith.constant 0 : i32
    return %c0_i32, %c0_i32_0 : i32, i32
  }
  func.func @transform_3(%arg0: i32, %arg1: i32) -> (i32, i32) {
    %c0_i32 = arith.constant 0 : i32
    %c0_i32_0 = arith.constant 0 : i32
    %c0_i32_1 = arith.constant 0 : i32
    return %c0_i32, %c0_i32_0 : i32, i32
  }
  func.func @transform_4(%arg0: i32, %arg1: i32) -> (i32, i32, i32) {
    %c0_i32 = arith.constant 0 : i32
    %c0_i32_0 = arith.constant 0 : i32
    %c0_i32_1 = arith.constant 0 : i32
    %c0_i32_2 = arith.constant 0 : i32
    return %c0_i32, %c0_i32_0, %c0_i32_1 : i32, i32, i32
  }
  func.func @transform_5(%arg0: i32, %arg1: i32) -> (i32, i32) {
    %c0_i32 = arith.constant 0 : i32
    %c0_i32_0 = arith.constant 0 : i32
    %c0_i32_1 = arith.constant 0 : i32
    return %c0_i32, %c0_i32_0 : i32, i32
  }
  func.func @transform_6(%arg0: i32, %arg1: i32) -> (i32, i32) {
    %c0_i32 = arith.constant 0 : i32
    %c0_i32_0 = arith.constant 0 : i32
    %c0_i32_1 = arith.constant 0 : i32
    return %c0_i32, %c0_i32_0 : i32, i32
  }
  func.func @transform_7(%arg0: i32, %arg1: i32) -> (i32, i32) {
    %c0_i32 = arith.constant 0 : i32
    %c0_i32_0 = arith.constant 0 : i32
    %c0_i32_1 = arith.constant 0 : i32
    return %c0_i32, %c0_i32_0 : i32, i32
  }
  func.func @transform_8(%arg0: i32, %arg1: i32) -> (i32, i32, i32) {
    %c0_i32 = arith.constant 0 : i32
    %c0_i32_0 = arith.constant 0 : i32
    %c0_i32_1 = arith.constant 0 : i32
    %c0_i32_2 = arith.constant 0 : i32
    return %c0_i32, %c0_i32_0, %c0_i32_1 : i32, i32, i32
  }
  func.func @transform_9(%arg0: i32, %arg1: i32) -> (i32, i32) {
    %c0_i32 = arith.constant 0 : i32
    %c0_i32_0 = arith.constant 0 : i32
    %c0_i32_1 = arith.constant 0 : i32
    return %c0_i32, %c0_i32_0 : i32, i32
  }
  func.func @transform_10(%arg0: i32, %arg1: i32) -> (i32, i32, i32) {
    %c0_i32 = arith.constant 0 : i32
    %c0_i32_0 = arith.constant 0 : i32
    return %arg0, %c0_i32, %arg1 : i32, i32, i32
  }
}

</mosaic_0001>

<llo_original>
// kernel: res_conv_critic_forward.1
$region0: #{res_conv_critic_forward.1}
  #allocation0 [shape = 'u32[]', space=smem, size = 0x4, offset = 0x4, fixed_abs, tag = 'smem constant byte address 0x4 - core index']
  #allocation1 [shape = 'u32[72,128]{1,0:T(1,128)}', space=vmem, size = 0x9000, scoped, tag = 'internal scratch']
  %s0 = inlined_call_operand.vmem [shape: bf16[2,8,512], index: 0, kind: input, shape index: {}, may-alias: {0,1}]
  %s1 = inlined_call_operand.vmem [shape: bf16[2,8,512], index: 1, kind: input, shape index: {}, may-alias: {0,1}]
  %s2 = inlined_call_operand.vmem [shape: bf16[8,8], index: 2, kind: input, shape index: {}]
  %s3 = inlined_call_operand.vmem [shape: f32[8,1], index: 3, kind: input, shape index: {}]
  %s4 = inlined_call_operand.vmem [shape: bf16[9,8,8], index: 4, kind: input, shape index: {}]
  %s5 = inlined_call_operand.vmem [shape: f32[8,1], index: 5, kind: input, shape index: {}]
  %s6 = inlined_call_operand.vmem [shape: bf16[8,8], index: 6, kind: input, shape index: {}]
  %s7 = inlined_call_operand.vmem [shape: f32[8,1], index: 7, kind: input, shape index: {}]
  %s8 = inlined_call_operand.vmem [shape: bf16[9,8,8], index: 8, kind: input, shape index: {}]
  %s9 = inlined_call_operand.vmem [shape: f32[8,1], index: 9, kind: input, shape index: {}]
  %s10 = inlined_call_operand.vmem [shape: bf16[2,8,384], index: 10, kind: output, shape index: {}]
  %s11 = sld [smem:[#allocation0]]
  $region73: #{res_conv_critic_forward.1} parent=0
    _
  %s13 = ssub.s32 1, %s11
  %s14 = scalar_select 0, %s13, %s11
  loop: start=0, step=1, limit=4
  $region2: #{res_conv_critic_forward.1} parent=0 // loop_pre_header
    _
  $region3: #{res_conv_critic_forward.1} parent=0 // loop_header
    %s16 = sphi 0, %s20
    %p17 = scmp.ge.s32.totalorder %s16, 4
    %s23 = sphi 0, %s35
    %s24 = sphi 0, %s31
    %s25 = sphi 0, %s23
    %s26 = sphi 0, %s24
    %s27 = sphi 0, %s25
    %s28 = sphi 0, %s26
    %s40 = sphi 0, %s42
    %s43 = sphi 0, %s40
    %s44 = sphi 0, %s43
    %s60 = sphi 0, %s44
    %s72 = sphi 0, %s74
    %s75 = sphi 0, %s72
    %s76 = sphi 0, %s75
    %s92 = sphi 0, %s76
    %s96 = sphi 0, %s96
    %s98 = sphi 0, %s96
    %s99 = sphi 0, %s98
    %s113 = sphi 0, %s99
    %s117 = sphi 0, %s117
    %s119 = sphi 0, %s117
    %s120 = sphi 0, %s119
    %s134 = sphi 0, %s120
    %s138 = sphi 0, %s138
    %s140 = sphi 0, %s138
    %s141 = sphi 0, %s140
    %s155 = sphi 0, %s141
    %s159 = sphi 0, %s159
    %s161 = sphi 0, %s159
    %s162 = sphi 0, %s161
    %s176 = sphi 0, %s162
    %s180 = sphi 0, %s180
    %s182 = sphi 0, %s180
    %s183 = sphi 0, %s182
    %s197 = sphi 0, %s183
    %s201 = sphi 0, %s201
    %s203 = sphi 0, %s201
    %s204 = sphi 0, %s203
    %s218 = sphi 0, %s204
    %s222 = sphi 0, %s222
    %s224 = sphi 0, %s222
    %s225 = sphi 0, %s224
    %s239 = sphi 0, %s225
    %s243 = sphi 0, %s243
    %s245 = sphi 0, %s243
    %s246 = sphi 0, %s245
    %s260 = sphi 0, %s246
    %s268 = sphi 0, %s270
    %s271 = sphi 0, %s268
    %s272 = sphi 0, %s271
    %s288 = sphi 0, %s272
  $region4: #{res_conv_critic_forward.1} parent=0 // loop_header_branch
    %19 = sbr.rel (%p17) target = $region8
  $region5: #{res_conv_critic_forward.1} parent=0 // loop_body
    %s21 = ssub.s32 %s16, 1
    %s22 = ssub.s32 %s16, 2
    %s29 = sadd.s32 1, %s24
    %p30 = scmp.ge.s32.totalorder %s29, 1
    %s31 = scalar_select %p30, 0, %s29
    %s32 = sadd.s32 1, %s23
    %s33 = scalar_select %p30, %s32, %s23
    %p34 = scmp.ge.s32.totalorder %s33, 2
    %s35 = scalar_select %p34, 0, %s33
    %s36 = ssub.s32 %s23, %s35
    %s37 = ssub.s32 %s24, %s31
    %s38 = sor.u32 %s36, %s37
    %p39 = scmp.eq.s32.totalorder %s38, 0
    %s41 = sadd.s32 %s40, 1
    %s42 = scalar_select %p39, %s40, %s41
    %p45 = pneg %p39
    %p46 = scmp.eq.s32.totalorder %s16, 1
    %p47 = por %p45, %p46
    %p48 = scmp.ne.s32.totalorder %s40, %s43
    %p49 = scmp.eq.s32.totalorder %s16, 0
    %p50 = por %p48, %p49
    %p51 = scmp.ne.s32.totalorder %s40, %s43
    %p52 = scmp.eq.s32.totalorder %s21, 1
    %p53 = por %p51, %p52
    %p54 = scmp.ne.s32.totalorder %s43, %s44
    %p55 = scmp.eq.s32.totalorder %s21, 0
    %p56 = por %p54, %p55
    %p57 = scmp.ne.s32.totalorder %s43, %s44
    %p58 = scmp.eq.s32.totalorder %s22, 1
    %p59 = por %p57, %p58
    %p61 = scmp.ne.s32.totalorder %s44, %s60
    %p62 = scmp.eq.s32.totalorder %s22, 0
    %p63 = por %p61, %p62
    %s64 = sadd.s32 %s24, 1
    %s65 = smul.u32 %s64, 3
    %s66 = sadd.s32 %s31, 1
    %s67 = smul.u32 %s66, 3
    %s68 = ssub.s32 %s23, %s35
    %s69 = ssub.s32 %s65, %s67
    %s70 = sor.u32 %s68, %s69
    %p71 = scmp.eq.s32.totalorder %s70, 0
    %s73 = sadd.s32 %s72, 1
    %s74 = scalar_select %p71, %s72, %s73
    %p77 = pneg %p71
    %p78 = scmp.eq.s32.totalorder %s16, 1
    %p79 = por %p77, %p78
    %p80 = scmp.ne.s32.totalorder %s72, %s75
    %p81 = scmp.eq.s32.totalorder %s16, 0
    %p82 = por %p80, %p81
    %p83 = scmp.ne.s32.totalorder %s72, %s75
    %p84 = scmp.eq.s32.totalorder %s21, 1
    %p85 = por %p83, %p84
    %p86 = scmp.ne.s32.totalorder %s75, %s76
    %p87 = scmp.eq.s32.totalorder %s21, 0
    %p88 = por %p86, %p87
    %p89 = scmp.ne.s32.totalorder %s75, %s76
    %p90 = scmp.eq.s32.totalorder %s22, 1
    %p91 = por %p89, %p90
    %p93 = scmp.ne.s32.totalorder %s76, %s92
    %p94 = scmp.eq.s32.totalorder %s22, 0
    %p95 = por %p93, %p94
    %s97 = sadd.s32 %s96, 1
    %p100 = scmp.eq.s32.totalorder %s16, 1
    %p101 = scmp.ne.s32.totalorder %s96, %s98
    %p102 = scmp.eq.s32.totalorder %s16, 0
    %p103 = por %p101, %p102
    %p104 = scmp.ne.s32.totalorder %s96, %s98
    %p105 = scmp.eq.s32.totalorder %s21, 1
    %p106 = por %p104, %p105
    %p107 = scmp.ne.s32.totalorder %s98, %s99
    %p108 = scmp.eq.s32.totalorder %s21, 0
    %p109 = por %p107, %p108
    %p110 = scmp.ne.s32.totalorder %s98, %s99
    %p111 = scmp.eq.s32.totalorder %s22, 1
    %p112 = por %p110, %p111
    %p114 = scmp.ne.s32.totalorder %s99, %s113
    %p115 = scmp.eq.s32.totalorder %s22, 0
    %p116 = por %p114, %p115
    %s118 = sadd.s32 %s117, 1
    %p121 = scmp.eq.s32.totalorder %s16, 1
    %p122 = scmp.ne.s32.totalorder %s117, %s119
    %p123 = scmp.eq.s32.totalorder %s16, 0
    %p124 = por %p122, %p123
    %p125 = scmp.ne.s32.totalorder %s117, %s119
    %p126 = scmp.eq.s32.totalorder %s21, 1
    %p127 = por %p125, %p126
    %p128 = scmp.ne.s32.totalorder %s119, %s120
    %p129 = scmp.eq.s32.totalorder %s21, 0
    %p130 = por %p128, %p129
    %p131 = scmp.ne.s32.totalorder %s119, %s120
    %p132 = scmp.eq.s32.totalorder %s22, 1
    %p133 = por %p131, %p132
    %p135 = scmp.ne.s32.totalorder %s120, %s134
    %p136 = scmp.eq.s32.totalorder %s22, 0
    %p137 = por %p135, %p136
    %s139 = sadd.s32 %s138, 1
    %p142 = scmp.eq.s32.totalorder %s16, 1
    %p143 = scmp.ne.s32.totalorder %s138, %s140
    %p144 = scmp.eq.s32.totalorder %s16, 0
    %p145 = por %p143, %p144
    %p146 = scmp.ne.s32.totalorder %s138, %s140
    %p147 = scmp.eq.s32.totalorder %s21, 1
    %p148 = por %p146, %p147
    %p149 = scmp.ne.s32.totalorder %s140, %s141
    %p150 = scmp.eq.s32.totalorder %s21, 0
    %p151 = por %p149, %p150
    %p152 = scmp.ne.s32.totalorder %s140, %s141
    %p153 = scmp.eq.s32.totalorder %s22, 1
    %p154 = por %p152, %p153
    %p156 = scmp.ne.s32.totalorder %s141, %s155
    %p157 = scmp.eq.s32.totalorder %s22, 0
    %p158 = por %p156, %p157
    %s160 = sadd.s32 %s159, 1
    %p163 = scmp.eq.s32.totalorder %s16, 1
    %p164 = scmp.ne.s32.totalorder %s159, %s161
    %p165 = scmp.eq.s32.totalorder %s16, 0
    %p166 = por %p164, %p165
    %p167 = scmp.ne.s32.totalorder %s159, %s161
    %p168 = scmp.eq.s32.totalorder %s21, 1
    %p169 = por %p167, %p168
    %p170 = scmp.ne.s32.totalorder %s161, %s162
    %p171 = scmp.eq.s32.totalorder %s21, 0
    %p172 = por %p170, %p171
    %p173 = scmp.ne.s32.totalorder %s161, %s162
    %p174 = scmp.eq.s32.totalorder %s22, 1
    %p175 = por %p173, %p174
    %p177 = scmp.ne.s32.totalorder %s162, %s176
    %p178 = scmp.eq.s32.totalorder %s22, 0
    %p179 = por %p177, %p178
    %s181 = sadd.s32 %s180, 1
    %p184 = scmp.eq.s32.totalorder %s16, 1
    %p185 = scmp.ne.s32.totalorder %s180, %s182
    %p186 = scmp.eq.s32.totalorder %s16, 0
    %p187 = por %p185, %p186
    %p188 = scmp.ne.s32.totalorder %s180, %s182
    %p189 = scmp.eq.s32.totalorder %s21, 1
    %p190 = por %p188, %p189
    %p191 = scmp.ne.s32.totalorder %s182, %s183
    %p192 = scmp.eq.s32.totalorder %s21, 0
    %p193 = por %p191, %p192
    %p194 = scmp.ne.s32.totalorder %s182, %s183
    %p195 = scmp.eq.s32.totalorder %s22, 1
    %p196 = por %p194, %p195
    %p198 = scmp.ne.s32.totalorder %s183, %s197
    %p199 = scmp.eq.s32.totalorder %s22, 0
    %p200 = por %p198, %p199
    %s202 = sadd.s32 %s201, 1
    %p205 = scmp.eq.s32.totalorder %s16, 1
    %p206 = scmp.ne.s32.totalorder %s201, %s203
    %p207 = scmp.eq.s32.totalorder %s16, 0
    %p208 = por %p206, %p207
    %p209 = scmp.ne.s32.totalorder %s201, %s203
    %p210 = scmp.eq.s32.totalorder %s21, 1
    %p211 = por %p209, %p210
    %p212 = scmp.ne.s32.totalorder %s203, %s204
    %p213 = scmp.eq.s32.totalorder %s21, 0
    %p214 = por %p212, %p213
    %p215 = scmp.ne.s32.totalorder %s203, %s204
    %p216 = scmp.eq.s32.totalorder %s22, 1
    %p217 = por %p215, %p216
    %p219 = scmp.ne.s32.totalorder %s204, %s218
    %p220 = scmp.eq.s32.totalorder %s22, 0
    %p221 = por %p219, %p220
    %s223 = sadd.s32 %s222, 1
    %p226 = scmp.eq.s32.totalorder %s16, 1
    %p227 = scmp.ne.s32.totalorder %s222, %s224
    %p228 = scmp.eq.s32.totalorder %s16, 0
    %p229 = por %p227, %p228
    %p230 = scmp.ne.s32.totalorder %s222, %s224
    %p231 = scmp.eq.s32.totalorder %s21, 1
    %p232 = por %p230, %p231
    %p233 = scmp.ne.s32.totalorder %s224, %s225
    %p234 = scmp.eq.s32.totalorder %s21, 0
    %p235 = por %p233, %p234
    %p236 = scmp.ne.s32.totalorder %s224, %s225
    %p237 = scmp.eq.s32.totalorder %s22, 1
    %p238 = por %p236, %p237
    %p240 = scmp.ne.s32.totalorder %s225, %s239
    %p241 = scmp.eq.s32.totalorder %s22, 0
    %p242 = por %p240, %p241
    %s244 = sadd.s32 %s243, 1
    %p247 = scmp.eq.s32.totalorder %s16, 1
    %p248 = scmp.ne.s32.totalorder %s243, %s245
    %p249 = scmp.eq.s32.totalorder %s16, 0
    %p250 = por %p248, %p249
    %p251 = scmp.ne.s32.totalorder %s243, %s245
    %p252 = scmp.eq.s32.totalorder %s21, 1
    %p253 = por %p251, %p252
    %p254 = scmp.ne.s32.totalorder %s245, %s246
    %p255 = scmp.eq.s32.totalorder %s21, 0
    %p256 = por %p254, %p255
    %p257 = scmp.ne.s32.totalorder %s245, %s246
    %p258 = scmp.eq.s32.totalorder %s22, 1
    %p259 = por %p257, %p258
    %p261 = scmp.ne.s32.totalorder %s246, %s260
    %p262 = scmp.eq.s32.totalorder %s22, 0
    %p263 = por %p261, %p262
    %s264 = ssub.s32 %s23, %s35
    %s265 = ssub.s32 %s24, %s31
    %s266 = sor.u32 %s264, %s265
    %p267 = scmp.eq.s32.totalorder %s266, 0
    %s269 = sadd.s32 %s268, 1
    %s270 = scalar_select %p267, %s268, %s269
    %p273 = pneg %p267
    %p274 = scmp.eq.s32.totalorder %s16, 1
    %p275 = por %p273, %p274
    %p276 = scmp.ne.s32.totalorder %s268, %s271
    %p277 = scmp.eq.s32.totalorder %s16, 0
    %p278 = por %p276, %p277
    %p279 = scmp.ne.s32.totalorder %s268, %s271
    %p280 = scmp.eq.s32.totalorder %s21, 1
    %p281 = por %p279, %p280
    %p282 = scmp.ne.s32.totalorder %s271, %s272
    %p283 = scmp.eq.s32.totalorder %s21, 0
    %p284 = por %p282, %p283
    %p285 = scmp.ne.s32.totalorder %s271, %s272
    %p286 = scmp.eq.s32.totalorder %s22, 1
    %p287 = por %p285, %p286
    %p289 = scmp.ne.s32.totalorder %s272, %s288
    %p290 = scmp.eq.s32.totalorder %s22, 0
    %p291 = por %p289, %p290
    %p292 = scmp.le.s32.totalorder 1, %s16
    %p293 = scmp.lt.s32.totalorder %s16, 3
    %p294 = pnand %p292, %p293
    %p295 = pneg %p294
    // Predicated region
    $region9: #{res_conv_critic_forward.1} parent=5 // pred_check
      _
    $region10: #{res_conv_critic_forward.1} parent=5 // pred_check_branch
      %297 = sbr.rel (%p294) target = $region12
    $region11: #{res_conv_critic_forward.1} parent=5 // pred_region
      %s298 = ssub.s32 %s16, 1
      // Predicated region
      $region13: #{res_conv_critic_forward.1} parent=11 // pred_check
        %p299 = pneg %p109
      $region14: #{res_conv_critic_forward.1} parent=11 // pred_check_branch
        %301 = sbr.rel (%p299) target = $region16
      $region15: #{res_conv_critic_forward.1} parent=11 // pred_region
        _
      $region16: #{res_conv_critic_forward.1} parent=11 // pred_fallthru
        _
      // Predicated region
      $region17: #{res_conv_critic_forward.1} parent=11 // pred_check
        %p302 = pneg %p130
      $region18: #{res_conv_critic_forward.1} parent=11 // pred_check_branch
        %304 = sbr.rel (%p302) target = $region20
      $region19: #{res_conv_critic_forward.1} parent=11 // pred_region
        _
      $region20: #{res_conv_critic_forward.1} parent=11 // pred_fallthru
        _
      // Predicated region
      $region21: #{res_conv_critic_forward.1} parent=11 // pred_check
        %p305 = pneg %p151
      $region22: #{res_conv_critic_forward.1} parent=11 // pred_check_branch
        %307 = sbr.rel (%p305) target = $region24
      $region23: #{res_conv_critic_forward.1} parent=11 // pred_region
        _
      $region24: #{res_conv_critic_forward.1} parent=11 // pred_fallthru
        _
      // Predicated region
      $region25: #{res_conv_critic_forward.1} parent=11 // pred_check
        %p308 = pneg %p172
      $region26: #{res_conv_critic_forward.1} parent=11 // pred_check_branch
        %310 = sbr.rel (%p308) target = $region28
      $region27: #{res_conv_critic_forward.1} parent=11 // pred_region
        _
      $region28: #{res_conv_critic_forward.1} parent=11 // pred_fallthru
        _
      // Predicated region
      $region29: #{res_conv_critic_forward.1} parent=11 // pred_check
        %p311 = pneg %p193
      $region30: #{res_conv_critic_forward.1} parent=11 // pred_check_branch
        %313 = sbr.rel (%p311) target = $region32
      $region31: #{res_conv_critic_forward.1} parent=11 // pred_region
        _
      $region32: #{res_conv_critic_forward.1} parent=11 // pred_fallthru
        _
      // Predicated region
      $region33: #{res_conv_critic_forward.1} parent=11 // pred_check
        %p314 = pneg %p214
      $region34: #{res_conv_critic_forward.1} parent=11 // pred_check_branch
        %316 = sbr.rel (%p314) target = $region36
      $region35: #{res_conv_critic_forward.1} parent=11 // pred_region
        _
      $region36: #{res_conv_critic_forward.1} parent=11 // pred_fallthru
        _
      // Predicated region
      $region37: #{res_conv_critic_forward.1} parent=11 // pred_check
        %p317 = pneg %p235
      $region38: #{res_conv_critic_forward.1} parent=11 // pred_check_branch
        %319 = sbr.rel (%p317) target = $region40
      $region39: #{res_conv_critic_forward.1} parent=11 // pred_region
        _
      $region40: #{res_conv_critic_forward.1} parent=11 // pred_fallthru
        _
      // Predicated region
      $region41: #{res_conv_critic_forward.1} parent=11 // pred_check
        %p320 = pneg %p256
      $region42: #{res_conv_critic_forward.1} parent=11 // pred_check_branch
        %322 = sbr.rel (%p320) target = $region44
      $region43: #{res_conv_critic_forward.1} parent=11 // pred_region
        _
      $region44: #{res_conv_critic_forward.1} parent=11 // pred_fallthru
        _
    $region12: #{res_conv_critic_forward.1} parent=5 // pred_fallthru
      _
    %p323 = scmp.lt.s32.totalorder %s16, 2
    // Predicated region
    $region45: #{res_conv_critic_forward.1} parent=5 // pred_check
      %p324 = pneg %p323
    $region46: #{res_conv_critic_forward.1} parent=5 // pred_check_branch
      %326 = sbr.rel (%p324) target = $region48
    $region47: #{res_conv_critic_forward.1} parent=5 // pred_region
      // Predicated region
      $region49: #{res_conv_critic_forward.1} parent=47 // pred_check
        %p327 = pneg %p50
      $region50: #{res_conv_critic_forward.1} parent=47 // pred_check_branch
        %329 = sbr.rel (%p327) target = $region52
      $region51: #{res_conv_critic_forward.1} parent=47 // pred_region
        %s330 = smul.u32 3, %s24
        %s331 = ssub.s32 4, %s330
        %p332 = scmp.lt.s32.totalorder %s331, 3
        %s333 = scalar_select %p332, %s331, 3
        %s334 = smul.u32 4, %s333
        %p335 = scmp.lt.s32.totalorder %s23, 1
        %s336 = scalar_select %p335, %s23, 1
        %p337 = scmp.lt.s32.totalorder %s330, 3
        %s338 = scalar_select %p337, %s330, 3
        %s339 = smul.addr %s336, 4
        %s340 = sadd.s32 %s338, %s339
        %s341 = smul.addr %s340, 4
        %s342 = scalar_lea.vmem %s0, %s341
        %s343 = smul.u32 3, %s24
        %s344 = ssub.s32 4, %s343
        %p345 = scmp.lt.s32.totalorder %s344, 3
        %s346 = scalar_select %p345, %s344, 3
        %s347 = smul.u32 4, %s346
      $region52: #{res_conv_critic_forward.1} parent=47 // pred_fallthru
        _
      // Predicated region
      $region53: #{res_conv_critic_forward.1} parent=47 // pred_check
        %p348 = pneg %p82
      $region54: #{res_conv_critic_forward.1} parent=47 // pred_check_branch
        %350 = sbr.rel (%p348) target = $region56
      $region55: #{res_conv_critic_forward.1} parent=47 // pred_region
        %s351 = sadd.s32 %s24, 1
        %s352 = smul.u32 %s351, 3
        %p353 = scmp.lt.s32.totalorder %s23, 1
        %s354 = scalar_select %p353, %s23, 1
        %p355 = scmp.lt.s32.totalorder %s352, 3
        %s356 = scalar_select %p355, %s352, 3
        %s357 = smul.addr %s354, 4
        %s358 = sadd.s32 %s356, %s357
        %s359 = smul.addr %s358, 4
        %s360 = scalar_lea.vmem %s1, %s359
        %s361 = sadd.s32 %s24, 1
        %s362 = smul.u32 %s361, 3
      $region56: #{res_conv_critic_forward.1} parent=47 // pred_fallthru
        _
    $region48: #{res_conv_critic_forward.1} parent=5 // pred_fallthru
      _
    %p363 = scmp.le.s32.totalorder 1, %s16
    %p364 = scmp.lt.s32.totalorder %s16, 3
    %p365 = pnand %p363, %p364
    %p366 = pneg %p365
    // Predicated region
    $region57: #{res_conv_critic_forward.1} parent=5 // pred_check
      _
    $region58: #{res_conv_critic_forward.1} parent=5 // pred_check_branch
      %368 = sbr.rel (%p365) target = $region60
    $region59: #{res_conv_critic_forward.1} parent=5 // pred_region
      %s369 = ssub.s32 %s16, 1
      %s370 = smul.u32 3, %s26
      %s371 = ssub.s32 4, %s370
      %p372 = scmp.lt.s32.totalorder %s371, 3
      %s373 = scalar_select %p372, %s371, 3
      %s374 = smul.u32 4, %s373
      %p375 = scmp.lt.s32.totalorder %s25, 1
      %s376 = scalar_select %p375, %s25, 1
      %p377 = scmp.lt.s32.totalorder %s370, 3
      %s378 = scalar_select %p377, %s370, 3
      %s379 = smul.addr %s376, 4
      %s380 = sadd.s32 %s378, %s379
      %s381 = smul.addr %s380, 4
      %s382 = scalar_lea.vmem %s0, %s381
      %p383 = pneg %p56
      %p384 = pneg %p53
      %s385 = sadd.s32 %s26, 1
      %s386 = smul.u32 %s385, 3
      %p387 = scmp.lt.s32.totalorder %s25, 1
      %s388 = scalar_select %p387, %s25, 1
      %p389 = scmp.lt.s32.totalorder %s386, 3
      %s390 = scalar_select %p389, %s386, 3
      %s391 = smul.addr %s388, 4
      %s392 = sadd.s32 %s390, %s391
      %s393 = smul.addr %s392, 4
      %s394 = scalar_lea.vmem %s1, %s393
      %p395 = pneg %p88
      %p396 = pneg %p85
      %p397 = pneg %p109
      %p398 = pneg %p106
      %p399 = pneg %p130
      %p400 = pneg %p127
      %p401 = pneg %p151
      %p402 = pneg %p148
      %p403 = pneg %p172
      %p404 = pneg %p169
      %p405 = pneg %p193
      %p406 = pneg %p190
      %p407 = pneg %p214
      %p408 = pneg %p211
      %p409 = pneg %p235
      %p410 = pneg %p232
      %p411 = pneg %p256
      %p412 = pneg %p253
      %p413 = pneg %p284
      %p414 = pneg %p281
      %s415 = smul.u32 3, %s26
      %p416 = scmp.lt.s32.totalorder %s25, 1
      %s417 = scalar_select %p416, %s25, 1
      %p418 = scmp.lt.s32.totalorder %s415, 2
      %s419 = scalar_select %p418, %s415, 2
      %s420 = smul.addr %s417, 3
      %s421 = sadd.s32 %s419, %s420
      %s422 = smul.addr %s421, 4
      %s423 = scalar_lea.vmem %s10, %s422
      %s424 = smul.u32 3, %s26
      %s425 = ssub.s32 4, %s424
      %p426 = scmp.lt.s32.totalorder %s425, 3
      %s427 = scalar_select %p426, %s425, 3
      %s428 = smul.u32 4, %s427
      %p429 = scmp.lt.s32.totalorder %s25, 1
      %s430 = scalar_select %p429, %s25, 1
      %p431 = scmp.lt.s32.totalorder %s424, 3
      %s432 = scalar_select %p431, %s424, 3
      %s433 = smul.addr %s430, 4
      %s434 = sadd.s32 %s432, %s433
      %s435 = smul.addr %s434, 4
      %s436 = scalar_lea.vmem %s0, %s435
      %s437 = smul.u32 3, %s26
      %s438 = ssub.s32 4, %s437
      %p439 = scmp.lt.s32.totalorder %s438, 3
      %s440 = scalar_select %p439, %s438, 3
      %s441 = smul.u32 4, %s440
      %s442 = sadd.s32 %s26, 1
      %s443 = smul.u32 %s442, 3
      %p444 = scmp.lt.s32.totalorder %s25, 1
      %s445 = scalar_select %p444, %s25, 1
      %p446 = scmp.lt.s32.totalorder %s443, 3
      %s447 = scalar_select %p446, %s443, 3
      %s448 = smul.addr %s445, 4
      %s449 = sadd.s32 %s447, %s448
      %s450 = smul.addr %s449, 4
      %s451 = scalar_lea.vmem %s1, %s450
      %s452 = sadd.s32 %s26, 1
      %s453 = smul.u32 %s452, 3
      %s454 = smul.u32 3, %s26
      %p455 = scmp.lt.s32.totalorder %s25, 1
      %s456 = scalar_select %p455, %s25, 1
      %p457 = scmp.lt.s32.totalorder %s454, 2
      %s458 = scalar_select %p457, %s454, 2
      %s459 = smul.addr %s456, 3
      %s460 = sadd.s32 %s458, %s459
      %s461 = smul.addr %s460, 4
      %s462 = scalar_lea.vmem %s10, %s461
      %s463 = smul.u32 3, %s26
      %v465 = vld [vmem:[%s436] sm:$0xff]
      %v466 = vld [vmem:[%s436 + $0x8] sm:$0xf]
      %v467 = vld [vmem:[%s451] sm:$0xf]
      %v470 = vunpack.c.l.b16 %v465
      %v471 = vunpack.c.h.b16 %v465
      %v472 = vunpack.c.l.b16 %v466
      %v473 = vpack.c.b16 %v470, %v470
      %v474 = vpack.c.b16 %v471, %v471
      %v475 = vpack.c.b16 %v472, %v472
      %v476 = vld [vmem:[%s2] sm:$0xf]
      %v477 = vld [vmem:[%s3] sm:$0xff]
      %479 = vset.pattern.permute.xlu0 0
      %480 = vperm.xlu0 %479, %v477
      %v481 = vpop.permute.xlu0 %480
      %vm483 = vcmask 64512
      %v485 = vsel %vm483, %v476, 0
      %vm487 = vcmask 1043456
      %v489 = vsel %vm487, %v473, 0
      %v492 = vsel %vm487, %v474, 0
      %v495 = vsel %vm487, %v475, 0
      %v498 = vsel %vm487, %v467, 0
      %500 = vmatpush.bf16.msra.mxu0 0
      %501 = vmatpush.bf16.msra.mxu0 0
      %502 = vmatpush.bf16.msra.mxu0 0
      %503 = vmatpush.bf16.msra.mxu0 0
      %504 = vmatpush.bf16.msra.mxu0 0
      %505 = vmatpush.bf16.msra.mxu0 0
      %506 = vmatpush.bf16.msra.mxu0 0
      %507 = vmatpush.bf16.msra.mxu0 %v489
      %508 = vmatmul.bf16.gmra.mxu0 %v485
      %v509 = vpop.f32.mrf.mxu0
      %v510 = vadd.f32 %v481, %v509
      %v511 = vpop.f32.mrf.mxu0
      %512 = vdwg.mxu0
      %513 = vmatpush.bf16.msra.mxu0 0
      %514 = vmatpush.bf16.msra.mxu0 0
      %515 = vmatpush.bf16.msra.mxu0 0
      %516 = vmatpush.bf16.msra.mxu0 0
      %517 = vmatpush.bf16.msra.mxu0 0
      %518 = vmatpush.bf16.msra.mxu0 0
      %519 = vmatpush.bf16.msra.mxu0 0
      %520 = vmatpush.bf16.msra.mxu0 %v492
      %521 = vmatmul.bf16.gmra.mxu0 %v485
      %v522 = vpop.f32.mrf.mxu0
      %v523 = vadd.f32 %v481, %v522
      %v524 = vpop.f32.mrf.mxu0
      %525 = vdwg.mxu0
      %526 = vmatpush.bf16.msra.mxu0 0
      %527 = vmatpush.bf16.msra.mxu0 0
      %528 = vmatpush.bf16.msra.mxu0 0
      %529 = vmatpush.bf16.msra.mxu0 0
      %530 = vmatpush.bf16.msra.mxu0 0
      %531 = vmatpush.bf16.msra.mxu0 0
      %532 = vmatpush.bf16.msra.mxu0 0
      %533 = vmatpush.bf16.msra.mxu0 %v495
      %534 = vmatmul.bf16.gmra.mxu0 %v485
      %v535 = vpop.f32.mrf.mxu0
      %v536 = vadd.f32 %v481, %v535
      %v537 = vpop.f32.mrf.mxu0
      %538 = vdwg.mxu0
      %539 = vmatpush.bf16.msra.mxu0 0
      %540 = vmatpush.bf16.msra.mxu0 0
      %541 = vmatpush.bf16.msra.mxu0 0
      %542 = vmatpush.bf16.msra.mxu0 0
      %543 = vmatpush.bf16.msra.mxu0 0
      %544 = vmatpush.bf16.msra.mxu0 0
      %545 = vmatpush.bf16.msra.mxu0 0
      %546 = vmatpush.bf16.msra.mxu0 %v498
      %547 = vmatmul.bf16.gmra.mxu0 %v485
      %v548 = vpop.f32.mrf.mxu0
      %v549 = vadd.f32 %v481, %v548
      %v550 = vpop.f32.mrf.mxu0
      %551 = vdwg.mxu0
      %v552 = vmax.f32 %v510, 0.0
      %v553 = vmax.f32 %v523, 0.0
      %v554 = vmax.f32 %v536, 0.0
      %v555 = vmax.f32 %v549, 0.0
      %v556 = vpack.c.bf16 %v553, %v552
      %v557 = vpack.c.bf16 %v555, %v554
      %v558 = vld [vmem:[%s4] sm:$0xf]
      %v559 = vld [vmem:[%s8] sm:$0xf]
      %s560 = scalar_lea.vmem %s4, 4
      %v561 = vld [vmem:[%s560] sm:$0xf]
      %v564 = vunpack.c.l.b16 %v556
      %v565 = vunpack.c.h.b16 %v556
      %v566 = vunpack.c.l.b16 %v557
      %v567 = vunpack.c.h.b16 %v557
      %v568 = vpack.c.b16 %v564, %v564
      %v569 = vpack.c.b16 %v565, %v565
      %v570 = vpack.c.b16 %v566, %v566
      %v571 = vpack.c.b16 %v567, %v567
      %572 = vrot.lane.b32.xlu0 %v568, 127
      %v573 = vpop.permute.xlu0 %572
      %574 = vrot.lane.b32.xlu0 %v569, 127
      %v575 = vpop.permute.xlu0 %574
      %576 = vrot.lane.b32.xlu0 %v570, 127
      %v577 = vpop.permute.xlu0 %576
      %578 = vrot.lane.b32.xlu0 %v571, 127
      %v579 = vpop.permute.xlu0 %578
      %vm580 = vcmask 1039360
      %v581 = vsel %vm580, %v573, %v575
      %v582 = vsel %vm580, %v575, %v577
      %v583 = vsel %vm580, %v577, %v579
      %v585 = vsel %vm483, %v561, 0
      %v588 = vsel %vm487, %v581, 0
      %v591 = vsel %vm487, %v582, 0
      %v594 = vsel %vm487, %v583, 0
      %596 = vmatpush.bf16.msra.mxu0 0
      %597 = vmatpush.bf16.msra.mxu0 0
      %598 = vmatpush.bf16.msra.mxu0 0
      %599 = vmatpush.bf16.msra.mxu0 0
      %600 = vmatpush.bf16.msra.mxu0 0
      %601 = vmatpush.bf16.msra.mxu0 0
      %602 = vmatpush.bf16.msra.mxu0 0
      %603 = vmatpush.bf16.msra.mxu0 %v588
      %604 = vmatmul.bf16.gmra.mxu0 %v585
      %v605 = vpop.f32.mrf.mxu0
      %v606 = vadd.f32 0.0, %v605
      %v607 = vpop.f32.mrf.mxu0
      %608 = vdwg.mxu0
      %609 = vmatpush.bf16.msra.mxu0 0
      %610 = vmatpush.bf16.msra.mxu0 0
      %611 = vmatpush.bf16.msra.mxu0 0
      %612 = vmatpush.bf16.msra.mxu0 0
      %613 = vmatpush.bf16.msra.mxu0 0
      %614 = vmatpush.bf16.msra.mxu0 0
      %615 = vmatpush.bf16.msra.mxu0 0
      %616 = vmatpush.bf16.msra.mxu0 %v591
      %617 = vmatmul.bf16.gmra.mxu0 %v585
      %v618 = vpop.f32.mrf.mxu0
      %v619 = vadd.f32 0.0, %v618
      %v620 = vpop.f32.mrf.mxu0
      %621 = vdwg.mxu0
      %622 = vmatpush.bf16.msra.mxu0 0
      %623 = vmatpush.bf16.msra.mxu0 0
      %624 = vmatpush.bf16.msra.mxu0 0
      %625 = vmatpush.bf16.msra.mxu0 0
      %626 = vmatpush.bf16.msra.mxu0 0
      %627 = vmatpush.bf16.msra.mxu0 0
      %628 = vmatpush.bf16.msra.mxu0 0
      %629 = vmatpush.bf16.msra.mxu0 %v594
      %630 = vmatmul.bf16.gmra.mxu0 %v585
      %v631 = vpop.f32.mrf.mxu0
      %v632 = vadd.f32 0.0, %v631
      %v633 = vpop.f32.mrf.mxu0
      %634 = vdwg.mxu0
      %v636 = vsel %vm483, %v558, 0
      %v639 = vsel %vm487, %v568, 0
      %v642 = vsel %vm487, %v569, 0
      %v645 = vsel %vm487, %v570, 0
      %647 = vmatpush.bf16.msra.mxu0 0
      %648 = vmatpush.bf16.msra.mxu0 0
      %649 = vmatpush.bf16.msra.mxu0 0
      %650 = vmatpush.bf16.msra.mxu0 0
      %651 = vmatpush.bf16.msra.mxu0 0
      %652 = vmatpush.bf16.msra.mxu0 0
      %653 = vmatpush.bf16.msra.mxu0 0
      %654 = vmatpush.bf16.msra.mxu0 %v639
      %655 = vmatmul.bf16.gmra.mxu0 %v636
      %v656 = vpop.f32.mrf.mxu0
      %v657 = vadd.f32 %v606, %v656
      %v658 = vpop.f32.mrf.mxu0
      %659 = vdwg.mxu0
      %660 = vmatpush.bf16.msra.mxu0 0
      %661 = vmatpush.bf16.msra.mxu0 0
      %662 = vmatpush.bf16.msra.mxu0 0
      %663 = vmatpush.bf16.msra.mxu0 0
      %664 = vmatpush.bf16.msra.mxu0 0
      %665 = vmatpush.bf16.msra.mxu0 0
      %666 = vmatpush.bf16.msra.mxu0 0
      %667 = vmatpush.bf16.msra.mxu0 %v642
      %668 = vmatmul.bf16.gmra.mxu0 %v636
      %v669 = vpop.f32.mrf.mxu0
      %v670 = vadd.f32 %v619, %v669
      %v671 = vpop.f32.mrf.mxu0
      %672 = vdwg.mxu0
      %673 = vmatpush.bf16.msra.mxu0 0
      %674 = vmatpush.bf16.msra.mxu0 0
      %675 = vmatpush.bf16.msra.mxu0 0
      %676 = vmatpush.bf16.msra.mxu0 0
      %677 = vmatpush.bf16.msra.mxu0 0
      %678 = vmatpush.bf16.msra.mxu0 0
      %679 = vmatpush.bf16.msra.mxu0 0
      %680 = vmatpush.bf16.msra.mxu0 %v645
      %681 = vmatmul.bf16.gmra.mxu0 %v636
      %v682 = vpop.f32.mrf.mxu0
      %v683 = vadd.f32 %v632, %v682
      %v684 = vpop.f32.mrf.mxu0
      %685 = vdwg.mxu0
      %s686 = scalar_lea.vmem %s8, 4
      %v687 = vld [vmem:[%s686] sm:$0xf]
      %689 = vrot.lane.b32.xlu0 %v473, 127
      %v690 = vpop.permute.xlu0 %689
      %691 = vrot.lane.b32.xlu0 %v474, 127
      %v692 = vpop.permute.xlu0 %691
      %693 = vrot.lane.b32.xlu0 %v475, 127
      %v694 = vpop.permute.xlu0 %693
      %695 = vrot.lane.b32.xlu0 %v467, 127
      %v696 = vpop.permute.xlu0 %695
      %v697 = vsel %vm580, %v690, %v692
      %v698 = vsel %vm580, %v692, %v694
      %v699 = vsel %vm580, %v694, %v696
      %v701 = vsel %vm483, %v687, 0
      %v704 = vsel %vm487, %v697, 0
      %v707 = vsel %vm487, %v698, 0
      %v710 = vsel %vm487, %v699, 0
      %712 = vmatpush.bf16.msra.mxu0 0
      %713 = vmatpush.bf16.msra.mxu0 0
      %714 = vmatpush.bf16.msra.mxu0 0
      %715 = vmatpush.bf16.msra.mxu0 0
      %716 = vmatpush.bf16.msra.mxu0 0
      %717 = vmatpush.bf16.msra.mxu0 0
      %718 = vmatpush.bf16.msra.mxu0 0
      %719 = vmatpush.bf16.msra.mxu0 %v704
      %720 = vmatmul.bf16.gmra.mxu0 %v701
      %v721 = vpop.f32.mrf.mxu0
      %v722 = vadd.f32 0.0, %v721
      %v723 = vpop.f32.mrf.mxu0
      %724 = vdwg.mxu0
      %725 = vmatpush.bf16.msra.mxu0 0
      %726 = vmatpush.bf16.msra.mxu0 0
      %727 = vmatpush.bf16.msra.mxu0 0
      %728 = vmatpush.bf16.msra.mxu0 0
      %729 = vmatpush.bf16.msra.mxu0 0
      %730 = vmatpush.bf16.msra.mxu0 0
      %731 = vmatpush.bf16.msra.mxu0 0
      %732 = vmatpush.bf16.msra.mxu0 %v707
      %733 = vmatmul.bf16.gmra.mxu0 %v701
      %v734 = vpop.f32.mrf.mxu0
      %v735 = vadd.f32 0.0, %v734
      %v736 = vpop.f32.mrf.mxu0
      %737 = vdwg.mxu0
      %738 = vmatpush.bf16.msra.mxu0 0
      %739 = vmatpush.bf16.msra.mxu0 0
      %740 = vmatpush.bf16.msra.mxu0 0
      %741 = vmatpush.bf16.msra.mxu0 0
      %742 = vmatpush.bf16.msra.mxu0 0
      %743 = vmatpush.bf16.msra.mxu0 0
      %744 = vmatpush.bf16.msra.mxu0 0
      %745 = vmatpush.bf16.msra.mxu0 %v710
      %746 = vmatmul.bf16.gmra.mxu0 %v701
      %v747 = vpop.f32.mrf.mxu0
      %v748 = vadd.f32 0.0, %v747
      %v749 = vpop.f32.mrf.mxu0
      %750 = vdwg.mxu0
      %v752 = vsel %vm483, %v559, 0
      %754 = vmatpush.bf16.msra.mxu0 0
      %755 = vmatpush.bf16.msra.mxu0 0
      %756 = vmatpush.bf16.msra.mxu0 0
      %757 = vmatpush.bf16.msra.mxu0 0
      %758 = vmatpush.bf16.msra.mxu0 0
      %759 = vmatpush.bf16.msra.mxu0 0
      %760 = vmatpush.bf16.msra.mxu0 0
      %761 = vmatpush.bf16.msra.mxu0 %v489
      %762 = vmatmul.bf16.gmra.mxu0 %v752
      %v763 = vpop.f32.mrf.mxu0
      %v764 = vadd.f32 %v722, %v763
      %v765 = vpop.f32.mrf.mxu0
      %766 = vdwg.mxu0
      %767 = vmatpush.bf16.msra.mxu0 0
      %768 = vmatpush.bf16.msra.mxu0 0
      %769 = vmatpush.bf16.msra.mxu0 0
      %770 = vmatpush.bf16.msra.mxu0 0
      %771 = vmatpush.bf16.msra.mxu0 0
      %772 = vmatpush.bf16.msra.mxu0 0
      %773 = vmatpush.bf16.msra.mxu0 0
      %774 = vmatpush.bf16.msra.mxu0 %v492
      %775 = vmatmul.bf16.gmra.mxu0 %v752
      %v776 = vpop.f32.mrf.mxu0
      %v777 = vadd.f32 %v735, %v776
      %v778 = vpop.f32.mrf.mxu0
      %779 = vdwg.mxu0
      %780 = vmatpush.bf16.msra.mxu0 0
      %781 = vmatpush.bf16.msra.mxu0 0
      %782 = vmatpush.bf16.msra.mxu0 0
      %783 = vmatpush.bf16.msra.mxu0 0
      %784 = vmatpush.bf16.msra.mxu0 0
      %785 = vmatpush.bf16.msra.mxu0 0
      %786 = vmatpush.bf16.msra.mxu0 0
      %787 = vmatpush.bf16.msra.mxu0 %v495
      %788 = vmatmul.bf16.gmra.mxu0 %v752
      %v789 = vpop.f32.mrf.mxu0
      %v790 = vadd.f32 %v748, %v789
      %v791 = vpop.f32.mrf.mxu0
      %792 = vdwg.mxu0
      %s793 = scalar_lea.vmem %s4, 8
      %v794 = vld [vmem:[%s793] sm:$0xf]
      %795 = vrot.lane.b32.xlu0 %v568, 126
      %v796 = vpop.permute.xlu0 %795
      %797 = vrot.lane.b32.xlu0 %v569, 126
      %v798 = vpop.permute.xlu0 %797
      %799 = vrot.lane.b32.xlu0 %v570, 126
      %v800 = vpop.permute.xlu0 %799
      %801 = vrot.lane.b32.xlu0 %v571, 126
      %v802 = vpop.permute.xlu0 %801
      %vm803 = vcmask 1031168
      %v804 = vsel %vm803, %v796, %v798
      %v805 = vsel %vm803, %v798, %v800
      %v806 = vsel %vm803, %v800, %v802
      %v808 = vsel %vm483, %v794, 0
      %v811 = vsel %vm487, %v804, 0
      %v814 = vsel %vm487, %v805, 0
      %v817 = vsel %vm487, %v806, 0
      %819 = vmatpush.bf16.msra.mxu0 0
      %820 = vmatpush.bf16.msra.mxu0 0
      %821 = vmatpush.bf16.msra.mxu0 0
      %822 = vmatpush.bf16.msra.mxu0 0
      %823 = vmatpush.bf16.msra.mxu0 0
      %824 = vmatpush.bf16.msra.mxu0 0
      %825 = vmatpush.bf16.msra.mxu0 0
      %826 = vmatpush.bf16.msra.mxu0 %v811
      %827 = vmatmul.bf16.gmra.mxu0 %v808
      %v828 = vpop.f32.mrf.mxu0
      %v829 = vadd.f32 0.0, %v828
      %v830 = vpop.f32.mrf.mxu0
      %831 = vdwg.mxu0
      %832 = vmatpush.bf16.msra.mxu0 0
      %833 = vmatpush.bf16.msra.mxu0 0
      %834 = vmatpush.bf16.msra.mxu0 0
      %835 = vmatpush.bf16.msra.mxu0 0
      %836 = vmatpush.bf16.msra.mxu0 0
      %837 = vmatpush.bf16.msra.mxu0 0
      %838 = vmatpush.bf16.msra.mxu0 0
      %839 = vmatpush.bf16.msra.mxu0 %v814
      %840 = vmatmul.bf16.gmra.mxu0 %v808
      %v841 = vpop.f32.mrf.mxu0
      %v842 = vadd.f32 0.0, %v841
      %v843 = vpop.f32.mrf.mxu0
      %844 = vdwg.mxu0
      %845 = vmatpush.bf16.msra.mxu0 0
      %846 = vmatpush.bf16.msra.mxu0 0
      %847 = vmatpush.bf16.msra.mxu0 0
      %848 = vmatpush.bf16.msra.mxu0 0
      %849 = vmatpush.bf16.msra.mxu0 0
      %850 = vmatpush.bf16.msra.mxu0 0
      %851 = vmatpush.bf16.msra.mxu0 0
      %852 = vmatpush.bf16.msra.mxu0 %v817
      %853 = vmatmul.bf16.gmra.mxu0 %v808
      %v854 = vpop.f32.mrf.mxu0
      %v855 = vadd.f32 0.0, %v854
      %v856 = vpop.f32.mrf.mxu0
      %857 = vdwg.mxu0
      %v858 = vadd.f32 %v657, %v829
      %v859 = vadd.f32 %v670, %v842
      %v860 = vadd.f32 %v683, %v855
      %s861 = scalar_lea.vmem %s8, 8
      %v862 = vld [vmem:[%s861] sm:$0xf]
      %863 = vrot.lane.b32.xlu0 %v473, 126
      %v864 = vpop.permute.xlu0 %863
      %865 = vrot.lane.b32.xlu0 %v474, 126
      %v866 = vpop.permute.xlu0 %865
      %867 = vrot.lane.b32.xlu0 %v475, 126
      %v868 = vpop.permute.xlu0 %867
      %869 = vrot.lane.b32.xlu0 %v467, 126
      %v870 = vpop.permute.xlu0 %869
      %v871 = vsel %vm803, %v864, %v866
      %v872 = vsel %vm803, %v866, %v868
      %v873 = vsel %vm803, %v868, %v870
      %v875 = vsel %vm483, %v862, 0
      %v878 = vsel %vm487, %v871, 0
      %v881 = vsel %vm487, %v872, 0
      %v884 = vsel %vm487, %v873, 0
      %886 = vmatpush.bf16.msra.mxu0 0
      %887 = vmatpush.bf16.msra.mxu0 0
      %888 = vmatpush.bf16.msra.mxu0 0
      %889 = vmatpush.bf16.msra.mxu0 0
      %890 = vmatpush.bf16.msra.mxu0 0
      %891 = vmatpush.bf16.msra.mxu0 0
      %892 = vmatpush.bf16.msra.mxu0 0
      %893 = vmatpush.bf16.msra.mxu0 %v878
      %894 = vmatmul.bf16.gmra.mxu0 %v875
      %v895 = vpop.f32.mrf.mxu0
      %v896 = vadd.f32 0.0, %v895
      %v897 = vpop.f32.mrf.mxu0
      %898 = vdwg.mxu0
      %899 = vmatpush.bf16.msra.mxu0 0
      %900 = vmatpush.bf16.msra.mxu0 0
      %901 = vmatpush.bf16.msra.mxu0 0
      %902 = vmatpush.bf16.msra.mxu0 0
      %903 = vmatpush.bf16.msra.mxu0 0
      %904 = vmatpush.bf16.msra.mxu0 0
      %905 = vmatpush.bf16.msra.mxu0 0
      %906 = vmatpush.bf16.msra.mxu0 %v881
      %907 = vmatmul.bf16.gmra.mxu0 %v875
      %v908 = vpop.f32.mrf.mxu0
      %v909 = vadd.f32 0.0, %v908
      %v910 = vpop.f32.mrf.mxu0
      %911 = vdwg.mxu0
      %912 = vmatpush.bf16.msra.mxu0 0
      %913 = vmatpush.bf16.msra.mxu0 0
      %914 = vmatpush.bf16.msra.mxu0 0
      %915 = vmatpush.bf16.msra.mxu0 0
      %916 = vmatpush.bf16.msra.mxu0 0
      %917 = vmatpush.bf16.msra.mxu0 0
      %918 = vmatpush.bf16.msra.mxu0 0
      %919 = vmatpush.bf16.msra.mxu0 %v884
      %920 = vmatmul.bf16.gmra.mxu0 %v875
      %v921 = vpop.f32.mrf.mxu0
      %v922 = vadd.f32 0.0, %v921
      %v923 = vpop.f32.mrf.mxu0
      %924 = vdwg.mxu0
      %v925 = vadd.f32 %v764, %v896
      %v926 = vadd.f32 %v777, %v909
      %v927 = vadd.f32 %v790, %v922
      %s928 = scalar_lea.vmem %s4, 12
      %v929 = vld [vmem:[%s928] sm:$0xf]
      %930 = vrot.lane.b32.xlu0 %v568, 109
      %v931 = vpop.permute.xlu0 %930
      %932 = vrot.lane.b32.xlu0 %v569, 109
      %v933 = vpop.permute.xlu0 %932
      %934 = vrot.lane.b32.xlu0 %v570, 109
      %v935 = vpop.permute.xlu0 %934
      %936 = vrot.lane.b32.xlu0 %v571, 109
      %v937 = vpop.permute.xlu0 %936
      %vm938 = vcmask 891904
      %v939 = vsel %vm938, %v931, %v933
      %v940 = vsel %vm938, %v933, %v935
      %v941 = vsel %vm938, %v935, %v937
      %v943 = vsel %vm483, %v929, 0
      %v946 = vsel %vm487, %v939, 0
      %v949 = vsel %vm487, %v940, 0
      %v952 = vsel %vm487, %v941, 0
      %954 = vmatpush.bf16.msra.mxu0 0
      %955 = vmatpush.bf16.msra.mxu0 0
      %956 = vmatpush.bf16.msra.mxu0 0
      %957 = vmatpush.bf16.msra.mxu0 0
      %958 = vmatpush.bf16.msra.mxu0 0
      %959 = vmatpush.bf16.msra.mxu0 0
      %960 = vmatpush.bf16.msra.mxu0 0
      %961 = vmatpush.bf16.msra.mxu0 %v946
      %962 = vmatmul.bf16.gmra.mxu0 %v943
      %v963 = vpop.f32.mrf.mxu0
      %v964 = vadd.f32 0.0, %v963
      %v965 = vpop.f32.mrf.mxu0
      %966 = vdwg.mxu0
      %967 = vmatpush.bf16.msra.mxu0 0
      %968 = vmatpush.bf16.msra.mxu0 0
      %969 = vmatpush.bf16.msra.mxu0 0
      %970 = vmatpush.bf16.msra.mxu0 0
      %971 = vmatpush.bf16.msra.mxu0 0
      %972 = vmatpush.bf16.msra.mxu0 0
      %973 = vmatpush.bf16.msra.mxu0 0
      %974 = vmatpush.bf16.msra.mxu0 %v949
      %975 = vmatmul.bf16.gmra.mxu0 %v943
      %v976 = vpop.f32.mrf.mxu0
      %v977 = vadd.f32 0.0, %v976
      %v978 = vpop.f32.mrf.mxu0
      %979 = vdwg.mxu0
      %980 = vmatpush.bf16.msra.mxu0 0
      %981 = vmatpush.bf16.msra.mxu0 0
      %982 = vmatpush.bf16.msra.mxu0 0
      %983 = vmatpush.bf16.msra.mxu0 0
      %984 = vmatpush.bf16.msra.mxu0 0
      %985 = vmatpush.bf16.msra.mxu0 0
      %986 = vmatpush.bf16.msra.mxu0 0
      %987 = vmatpush.bf16.msra.mxu0 %v952
      %988 = vmatmul.bf16.gmra.mxu0 %v943
      %v989 = vpop.f32.mrf.mxu0
      %v990 = vadd.f32 0.0, %v989
      %v991 = vpop.f32.mrf.mxu0
      %992 = vdwg.mxu0
      %v993 = vadd.f32 %v858, %v964
      %v994 = vadd.f32 %v859, %v977
      %v995 = vadd.f32 %v860, %v990
      %s996 = scalar_lea.vmem %s8, 12
      %v997 = vld [vmem:[%s996] sm:$0xf]
      %998 = vrot.lane.b32.xlu0 %v473, 109
      %v999 = vpop.permute.xlu0 %998
      %1000 = vrot.lane.b32.xlu0 %v474, 109
      %v1001 = vpop.permute.xlu0 %1000
      %1002 = vrot.lane.b32.xlu0 %v475, 109
      %v1003 = vpop.permute.xlu0 %1002
      %1004 = vrot.lane.b32.xlu0 %v467, 109
      %v1005 = vpop.permute.xlu0 %1004
      %v1006 = vsel %vm938, %v999, %v1001
      %v1007 = vsel %vm938, %v1001, %v1003
      %v1008 = vsel %vm938, %v1003, %v1005
      %v1010 = vsel %vm483, %v997, 0
      %v1013 = vsel %vm487, %v1006, 0
      %v1016 = vsel %vm487, %v1007, 0
      %v1019 = vsel %vm487, %v1008, 0
      %1021 = vmatpush.bf16.msra.mxu0 0
      %1022 = vmatpush.bf16.msra.mxu0 0
      %1023 = vmatpush.bf16.msra.mxu0 0
      %1024 = vmatpush.bf16.msra.mxu0 0
      %1025 = vmatpush.bf16.msra.mxu0 0
      %1026 = vmatpush.bf16.msra.mxu0 0
      %1027 = vmatpush.bf16.msra.mxu0 0
      %1028 = vmatpush.bf16.msra.mxu0 %v1013
      %1029 = vmatmul.bf16.gmra.mxu0 %v1010
      %v1030 = vpop.f32.mrf.mxu0
      %v1031 = vadd.f32 0.0, %v1030
      %v1032 = vpop.f32.mrf.mxu0
      %1033 = vdwg.mxu0
      %1034 = vmatpush.bf16.msra.mxu0 0
      %1035 = vmatpush.bf16.msra.mxu0 0
      %1036 = vmatpush.bf16.msra.mxu0 0
      %1037 = vmatpush.bf16.msra.mxu0 0
      %1038 = vmatpush.bf16.msra.mxu0 0
      %1039 = vmatpush.bf16.msra.mxu0 0
      %1040 = vmatpush.bf16.msra.mxu0 0
      %1041 = vmatpush.bf16.msra.mxu0 %v1016
      %1042 = vmatmul.bf16.gmra.mxu0 %v1010
      %v1043 = vpop.f32.mrf.mxu0
      %v1044 = vadd.f32 0.0, %v1043
      %v1045 = vpop.f32.mrf.mxu0
      %1046 = vdwg.mxu0
      %1047 = vmatpush.bf16.msra.mxu0 0
      %1048 = vmatpush.bf16.msra.mxu0 0
      %1049 = vmatpush.bf16.msra.mxu0 0
      %1050 = vmatpush.bf16.msra.mxu0 0
      %1051 = vmatpush.bf16.msra.mxu0 0
      %1052 = vmatpush.bf16.msra.mxu0 0
      %1053 = vmatpush.bf16.msra.mxu0 0
      %1054 = vmatpush.bf16.msra.mxu0 %v1019
      %1055 = vmatmul.bf16.gmra.mxu0 %v1010
      %v1056 = vpop.f32.mrf.mxu0
      %v1057 = vadd.f32 0.0, %v1056
      %v1058 = vpop.f32.mrf.mxu0
      %1059 = vdwg.mxu0
      %v1060 = vadd.f32 %v925, %v1031
      %v1061 = vadd.f32 %v926, %v1044
      %v1062 = vadd.f32 %v927, %v1057
      %s1063 = scalar_lea.vmem %s4, 16
      %v1064 = vld [vmem:[%s1063] sm:$0xf]
      %1065 = vrot.lane.b32.xlu0 %v568, 108
      %v1066 = vpop.permute.xlu0 %1065
      %1067 = vrot.lane.b32.xlu0 %v569, 108
      %v1068 = vpop.permute.xlu0 %1067
      %1069 = vrot.lane.b32.xlu0 %v570, 108
      %v1070 = vpop.permute.xlu0 %1069
      %1071 = vrot.lane.b32.xlu0 %v571, 108
      %v1072 = vpop.permute.xlu0 %1071
      %vm1073 = vcmask 883712
      %v1074 = vsel %vm1073, %v1066, %v1068
      %v1075 = vsel %vm1073, %v1068, %v1070
      %v1076 = vsel %vm1073, %v1070, %v1072
      %v1078 = vsel %vm483, %v1064, 0
      %v1081 = vsel %vm487, %v1074, 0
      %v1084 = vsel %vm487, %v1075, 0
      %v1087 = vsel %vm487, %v1076, 0
      %1089 = vmatpush.bf16.msra.mxu0 0
      %1090 = vmatpush.bf16.msra.mxu0 0
      %1091 = vmatpush.bf16.msra.mxu0 0
      %1092 = vmatpush.bf16.msra.mxu0 0
      %1093 = vmatpush.bf16.msra.mxu0 0
      %1094 = vmatpush.bf16.msra.mxu0 0
      %1095 = vmatpush.bf16.msra.mxu0 0
      %1096 = vmatpush.bf16.msra.mxu0 %v1081
      %1097 = vmatmul.bf16.gmra.mxu0 %v1078
      %v1098 = vpop.f32.mrf.mxu0
      %v1099 = vadd.f32 0.0, %v1098
      %v1100 = vpop.f32.mrf.mxu0
      %1101 = vdwg.mxu0
      %1102 = vmatpush.bf16.msra.mxu0 0
      %1103 = vmatpush.bf16.msra.mxu0 0
      %1104 = vmatpush.bf16.msra.mxu0 0
      %1105 = vmatpush.bf16.msra.mxu0 0
      %1106 = vmatpush.bf16.msra.mxu0 0
      %1107 = vmatpush.bf16.msra.mxu0 0
      %1108 = vmatpush.bf16.msra.mxu0 0
      %1109 = vmatpush.bf16.msra.mxu0 %v1084
      %1110 = vmatmul.bf16.gmra.mxu0 %v1078
      %v1111 = vpop.f32.mrf.mxu0
      %v1112 = vadd.f32 0.0, %v1111
      %v1113 = vpop.f32.mrf.mxu0
      %1114 = vdwg.mxu0
      %1115 = vmatpush.bf16.msra.mxu0 0
      %1116 = vmatpush.bf16.msra.mxu0 0
      %1117 = vmatpush.bf16.msra.mxu0 0
      %1118 = vmatpush.bf16.msra.mxu0 0
      %1119 = vmatpush.bf16.msra.mxu0 0
      %1120 = vmatpush.bf16.msra.mxu0 0
      %1121 = vmatpush.bf16.msra.mxu0 0
      %1122 = vmatpush.bf16.msra.mxu0 %v1087
      %1123 = vmatmul.bf16.gmra.mxu0 %v1078
      %v1124 = vpop.f32.mrf.mxu0
      %v1125 = vadd.f32 0.0, %v1124
      %v1126 = vpop.f32.mrf.mxu0
      %1127 = vdwg.mxu0
      %v1128 = vadd.f32 %v993, %v1099
      %v1129 = vadd.f32 %v994, %v1112
      %v1130 = vadd.f32 %v995, %v1125
      %s1131 = scalar_lea.vmem %s8, 16
      %v1132 = vld [vmem:[%s1131] sm:$0xf]
      %1133 = vrot.lane.b32.xlu0 %v473, 108
      %v1134 = vpop.permute.xlu0 %1133
      %1135 = vrot.lane.b32.xlu0 %v474, 108
      %v1136 = vpop.permute.xlu0 %1135
      %1137 = vrot.lane.b32.xlu0 %v475, 108
      %v1138 = vpop.permute.xlu0 %1137
      %1139 = vrot.lane.b32.xlu0 %v467, 108
      %v1140 = vpop.permute.xlu0 %1139
      %v1141 = vsel %vm1073, %v1134, %v1136
      %v1142 = vsel %vm1073, %v1136, %v1138
      %v1143 = vsel %vm1073, %v1138, %v1140
      %v1145 = vsel %vm483, %v1132, 0
      %v1148 = vsel %vm487, %v1141, 0
      %v1151 = vsel %vm487, %v1142, 0
      %v1154 = vsel %vm487, %v1143, 0
      %1156 = vmatpush.bf16.msra.mxu0 0
      %1157 = vmatpush.bf16.msra.mxu0 0
      %1158 = vmatpush.bf16.msra.mxu0 0
      %1159 = vmatpush.bf16.msra.mxu0 0
      %1160 = vmatpush.bf16.msra.mxu0 0
      %1161 = vmatpush.bf16.msra.mxu0 0
      %1162 = vmatpush.bf16.msra.mxu0 0
      %1163 = vmatpush.bf16.msra.mxu0 %v1148
      %1164 = vmatmul.bf16.gmra.mxu0 %v1145
      %v1165 = vpop.f32.mrf.mxu0
      %v1166 = vadd.f32 0.0, %v1165
      %v1167 = vpop.f32.mrf.mxu0
      %1168 = vdwg.mxu0
      %1169 = vmatpush.bf16.msra.mxu0 0
      %1170 = vmatpush.bf16.msra.mxu0 0
      %1171 = vmatpush.bf16.msra.mxu0 0
      %1172 = vmatpush.bf16.msra.mxu0 0
      %1173 = vmatpush.bf16.msra.mxu0 0
      %1174 = vmatpush.bf16.msra.mxu0 0
      %1175 = vmatpush.bf16.msra.mxu0 0
      %1176 = vmatpush.bf16.msra.mxu0 %v1151
      %1177 = vmatmul.bf16.gmra.mxu0 %v1145
      %v1178 = vpop.f32.mrf.mxu0
      %v1179 = vadd.f32 0.0, %v1178
      %v1180 = vpop.f32.mrf.mxu0
      %1181 = vdwg.mxu0
      %1182 = vmatpush.bf16.msra.mxu0 0
      %1183 = vmatpush.bf16.msra.mxu0 0
      %1184 = vmatpush.bf16.msra.mxu0 0
      %1185 = vmatpush.bf16.msra.mxu0 0
      %1186 = vmatpush.bf16.msra.mxu0 0
      %1187 = vmatpush.bf16.msra.mxu0 0
      %1188 = vmatpush.bf16.msra.mxu0 0
      %1189 = vmatpush.bf16.msra.mxu0 %v1154
      %1190 = vmatmul.bf16.gmra.mxu0 %v1145
      %v1191 = vpop.f32.mrf.mxu0
      %v1192 = vadd.f32 0.0, %v1191
      %v1193 = vpop.f32.mrf.mxu0
      %1194 = vdwg.mxu0
      %v1195 = vadd.f32 %v1060, %v1166
      %v1196 = vadd.f32 %v1061, %v1179
      %v1197 = vadd.f32 %v1062, %v1192
      %s1198 = scalar_lea.vmem %s4, 20
      %v1199 = vld [vmem:[%s1198] sm:$0xf]
      %1200 = vrot.lane.b32.xlu0 %v568, 107
      %v1201 = vpop.permute.xlu0 %1200
      %1202 = vrot.lane.b32.xlu0 %v569, 107
      %v1203 = vpop.permute.xlu0 %1202
      %1204 = vrot.lane.b32.xlu0 %v570, 107
      %v1205 = vpop.permute.xlu0 %1204
      %1206 = vrot.lane.b32.xlu0 %v571, 107
      %v1207 = vpop.permute.xlu0 %1206
      %vm1208 = vcmask 875520
      %v1209 = vsel %vm1208, %v1201, %v1203
      %v1210 = vsel %vm1208, %v1203, %v1205
      %v1211 = vsel %vm1208, %v1205, %v1207
      %v1213 = vsel %vm483, %v1199, 0
      %v1216 = vsel %vm487, %v1209, 0
      %v1219 = vsel %vm487, %v1210, 0
      %v1222 = vsel %vm487, %v1211, 0
      %1224 = vmatpush.bf16.msra.mxu0 0
      %1225 = vmatpush.bf16.msra.mxu0 0
      %1226 = vmatpush.bf16.msra.mxu0 0
      %1227 = vmatpush.bf16.msra.mxu0 0
      %1228 = vmatpush.bf16.msra.mxu0 0
      %1229 = vmatpush.bf16.msra.mxu0 0
      %1230 = vmatpush.bf16.msra.mxu0 0
      %1231 = vmatpush.bf16.msra.mxu0 %v1216
      %1232 = vmatmul.bf16.gmra.mxu0 %v1213
      %v1233 = vpop.f32.mrf.mxu0
      %v1234 = vadd.f32 0.0, %v1233
      %v1235 = vpop.f32.mrf.mxu0
      %1236 = vdwg.mxu0
      %1237 = vmatpush.bf16.msra.mxu0 0
      %1238 = vmatpush.bf16.msra.mxu0 0
      %1239 = vmatpush.bf16.msra.mxu0 0
      %1240 = vmatpush.bf16.msra.mxu0 0
      %1241 = vmatpush.bf16.msra.mxu0 0
      %1242 = vmatpush.bf16.msra.mxu0 0
      %1243 = vmatpush.bf16.msra.mxu0 0
      %1244 = vmatpush.bf16.msra.mxu0 %v1219
      %1245 = vmatmul.bf16.gmra.mxu0 %v1213
      %v1246 = vpop.f32.mrf.mxu0
      %v1247 = vadd.f32 0.0, %v1246
      %v1248 = vpop.f32.mrf.mxu0
      %1249 = vdwg.mxu0
      %1250 = vmatpush.bf16.msra.mxu0 0
      %1251 = vmatpush.bf16.msra.mxu0 0
      %1252 = vmatpush.bf16.msra.mxu0 0
      %1253 = vmatpush.bf16.msra.mxu0 0
      %1254 = vmatpush.bf16.msra.mxu0 0
      %1255 = vmatpush.bf16.msra.mxu0 0
      %1256 = vmatpush.bf16.msra.mxu0 0
      %1257 = vmatpush.bf16.msra.mxu0 %v1222
      %1258 = vmatmul.bf16.gmra.mxu0 %v1213
      %v1259 = vpop.f32.mrf.mxu0
      %v1260 = vadd.f32 0.0, %v1259
      %v1261 = vpop.f32.mrf.mxu0
      %1262 = vdwg.mxu0
      %v1263 = vadd.f32 %v1128, %v1234
      %v1264 = vadd.f32 %v1129, %v1247
      %v1265 = vadd.f32 %v1130, %v1260
      %s1266 = scalar_lea.vmem %s8, 20
      %v1267 = vld [vmem:[%s1266] sm:$0xf]
      %1268 = vrot.lane.b32.xlu0 %v473, 107
      %v1269 = vpop.permute.xlu0 %1268
      %1270 = vrot.lane.b32.xlu0 %v474, 107
      %v1271 = vpop.permute.xlu0 %1270
      %1272 = vrot.lane.b32.xlu0 %v475, 107
      %v1273 = vpop.permute.xlu0 %1272
      %1274 = vrot.lane.b32.xlu0 %v467, 107
      %v1275 = vpop.permute.xlu0 %1274
      %v1276 = vsel %vm1208, %v1269, %v1271
      %v1277 = vsel %vm1208, %v1271, %v1273
      %v1278 = vsel %vm1208, %v1273, %v1275
      %v1280 = vsel %vm483, %v1267, 0
      %v1283 = vsel %vm487, %v1276, 0
      %v1286 = vsel %vm487, %v1277, 0
      %v1289 = vsel %vm487, %v1278, 0
      %1291 = vmatpush.bf16.msra.mxu0 0
      %1292 = vmatpush.bf16.msra.mxu0 0
      %1293 = vmatpush.bf16.msra.mxu0 0
      %1294 = vmatpush.bf16.msra.mxu0 0
      %1295 = vmatpush.bf16.msra.mxu0 0
      %1296 = vmatpush.bf16.msra.mxu0 0
      %1297 = vmatpush.bf16.msra.mxu0 0
      %1298 = vmatpush.bf16.msra.mxu0 %v1283
      %1299 = vmatmul.bf16.gmra.mxu0 %v1280
      %v1300 = vpop.f32.mrf.mxu0
      %v1301 = vadd.f32 0.0, %v1300
      %v1302 = vpop.f32.mrf.mxu0
      %1303 = vdwg.mxu0
      %1304 = vmatpush.bf16.msra.mxu0 0
      %1305 = vmatpush.bf16.msra.mxu0 0
      %1306 = vmatpush.bf16.msra.mxu0 0
      %1307 = vmatpush.bf16.msra.mxu0 0
      %1308 = vmatpush.bf16.msra.mxu0 0
      %1309 = vmatpush.bf16.msra.mxu0 0
      %1310 = vmatpush.bf16.msra.mxu0 0
      %1311 = vmatpush.bf16.msra.mxu0 %v1286
      %1312 = vmatmul.bf16.gmra.mxu0 %v1280
      %v1313 = vpop.f32.mrf.mxu0
      %v1314 = vadd.f32 0.0, %v1313
      %v1315 = vpop.f32.mrf.mxu0
      %1316 = vdwg.mxu0
      %1317 = vmatpush.bf16.msra.mxu0 0
      %1318 = vmatpush.bf16.msra.mxu0 0
      %1319 = vmatpush.bf16.msra.mxu0 0
      %1320 = vmatpush.bf16.msra.mxu0 0
      %1321 = vmatpush.bf16.msra.mxu0 0
      %1322 = vmatpush.bf16.msra.mxu0 0
      %1323 = vmatpush.bf16.msra.mxu0 0
      %1324 = vmatpush.bf16.msra.mxu0 %v1289
      %1325 = vmatmul.bf16.gmra.mxu0 %v1280
      %v1326 = vpop.f32.mrf.mxu0
      %v1327 = vadd.f32 0.0, %v1326
      %v1328 = vpop.f32.mrf.mxu0
      %1329 = vdwg.mxu0
      %v1330 = vadd.f32 %v1195, %v1301
      %v1331 = vadd.f32 %v1196, %v1314
      %v1332 = vadd.f32 %v1197, %v1327
      %s1333 = scalar_lea.vmem %s4, 24
      %v1334 = vld [vmem:[%s1333] sm:$0xf]
      %1335 = vrot.lane.b32.xlu0 %v568, 90
      %v1336 = vpop.permute.xlu0 %1335
      %1337 = vrot.lane.b32.xlu0 %v569, 90
      %v1338 = vpop.permute.xlu0 %1337
      %1339 = vrot.lane.b32.xlu0 %v570, 90
      %v1340 = vpop.permute.xlu0 %1339
      %1341 = vrot.lane.b32.xlu0 %v571, 90
      %v1342 = vpop.permute.xlu0 %1341
      %vm1343 = vcmask 736256
      %v1344 = vsel %vm1343, %v1336, %v1338
      %v1345 = vsel %vm1343, %v1338, %v1340
      %v1346 = vsel %vm1343, %v1340, %v1342
      %v1348 = vsel %vm483, %v1334, 0
      %v1351 = vsel %vm487, %v1344, 0
      %v1354 = vsel %vm487, %v1345, 0
      %v1357 = vsel %vm487, %v1346, 0
      %1359 = vmatpush.bf16.msra.mxu0 0
      %1360 = vmatpush.bf16.msra.mxu0 0
      %1361 = vmatpush.bf16.msra.mxu0 0
      %1362 = vmatpush.bf16.msra.mxu0 0
      %1363 = vmatpush.bf16.msra.mxu0 0
      %1364 = vmatpush.bf16.msra.mxu0 0
      %1365 = vmatpush.bf16.msra.mxu0 0
      %1366 = vmatpush.bf16.msra.mxu0 %v1351
      %1367 = vmatmul.bf16.gmra.mxu0 %v1348
      %v1368 = vpop.f32.mrf.mxu0
      %v1369 = vadd.f32 0.0, %v1368
      %v1370 = vpop.f32.mrf.mxu0
      %1371 = vdwg.mxu0
      %1372 = vmatpush.bf16.msra.mxu0 0
      %1373 = vmatpush.bf16.msra.mxu0 0
      %1374 = vmatpush.bf16.msra.mxu0 0
      %1375 = vmatpush.bf16.msra.mxu0 0
      %1376 = vmatpush.bf16.msra.mxu0 0
      %1377 = vmatpush.bf16.msra.mxu0 0
      %1378 = vmatpush.bf16.msra.mxu0 0
      %1379 = vmatpush.bf16.msra.mxu0 %v1354
      %1380 = vmatmul.bf16.gmra.mxu0 %v1348
      %v1381 = vpop.f32.mrf.mxu0
      %v1382 = vadd.f32 0.0, %v1381
      %v1383 = vpop.f32.mrf.mxu0
      %1384 = vdwg.mxu0
      %1385 = vmatpush.bf16.msra.mxu0 0
      %1386 = vmatpush.bf16.msra.mxu0 0
      %1387 = vmatpush.bf16.msra.mxu0 0
      %1388 = vmatpush.bf16.msra.mxu0 0
      %1389 = vmatpush.bf16.msra.mxu0 0
      %1390 = vmatpush.bf16.msra.mxu0 0
      %1391 = vmatpush.bf16.msra.mxu0 0
      %1392 = vmatpush.bf16.msra.mxu0 %v1357
      %1393 = vmatmul.bf16.gmra.mxu0 %v1348
      %v1394 = vpop.f32.mrf.mxu0
      %v1395 = vadd.f32 0.0, %v1394
      %v1396 = vpop.f32.mrf.mxu0
      %1397 = vdwg.mxu0
      %v1398 = vadd.f32 %v1263, %v1369
      %v1399 = vadd.f32 %v1264, %v1382
      %v1400 = vadd.f32 %v1265, %v1395
      %s1401 = scalar_lea.vmem %s8, 24
      %v1402 = vld [vmem:[%s1401] sm:$0xf]
      %1403 = vrot.lane.b32.xlu0 %v473, 90
      %v1404 = vpop.permute.xlu0 %1403
      %1405 = vrot.lane.b32.xlu0 %v474, 90
      %v1406 = vpop.permute.xlu0 %1405
      %1407 = vrot.lane.b32.xlu0 %v475, 90
      %v1408 = vpop.permute.xlu0 %1407
      %1409 = vrot.lane.b32.xlu0 %v467, 90
      %v1410 = vpop.permute.xlu0 %1409
      %v1411 = vsel %vm1343, %v1404, %v1406
      %v1412 = vsel %vm1343, %v1406, %v1408
      %v1413 = vsel %vm1343, %v1408, %v1410
      %v1415 = vsel %vm483, %v1402, 0
      %v1418 = vsel %vm487, %v1411, 0
      %v1421 = vsel %vm487, %v1412, 0
      %v1424 = vsel %vm487, %v1413, 0
      %1426 = vmatpush.bf16.msra.mxu0 0
      %1427 = vmatpush.bf16.msra.mxu0 0
      %1428 = vmatpush.bf16.msra.mxu0 0
      %1429 = vmatpush.bf16.msra.mxu0 0
      %1430 = vmatpush.bf16.msra.mxu0 0
      %1431 = vmatpush.bf16.msra.mxu0 0
      %1432 = vmatpush.bf16.msra.mxu0 0
      %1433 = vmatpush.bf16.msra.mxu0 %v1418
      %1434 = vmatmul.bf16.gmra.mxu0 %v1415
      %v1435 = vpop.f32.mrf.mxu0
      %v1436 = vadd.f32 0.0, %v1435
      %v1437 = vpop.f32.mrf.mxu0
      %1438 = vdwg.mxu0
      %1439 = vmatpush.bf16.msra.mxu0 0
      %1440 = vmatpush.bf16.msra.mxu0 0
      %1441 = vmatpush.bf16.msra.mxu0 0
      %1442 = vmatpush.bf16.msra.mxu0 0
      %1443 = vmatpush.bf16.msra.mxu0 0
      %1444 = vmatpush.bf16.msra.mxu0 0
      %1445 = vmatpush.bf16.msra.mxu0 0
      %1446 = vmatpush.bf16.msra.mxu0 %v1421
      %1447 = vmatmul.bf16.gmra.mxu0 %v1415
      %v1448 = vpop.f32.mrf.mxu0
      %v1449 = vadd.f32 0.0, %v1448
      %v1450 = vpop.f32.mrf.mxu0
      %1451 = vdwg.mxu0
      %1452 = vmatpush.bf16.msra.mxu0 0
      %1453 = vmatpush.bf16.msra.mxu0 0
      %1454 = vmatpush.bf16.msra.mxu0 0
      %1455 = vmatpush.bf16.msra.mxu0 0
      %1456 = vmatpush.bf16.msra.mxu0 0
      %1457 = vmatpush.bf16.msra.mxu0 0
      %1458 = vmatpush.bf16.msra.mxu0 0
      %1459 = vmatpush.bf16.msra.mxu0 %v1424
      %1460 = vmatmul.bf16.gmra.mxu0 %v1415
      %v1461 = vpop.f32.mrf.mxu0
      %v1462 = vadd.f32 0.0, %v1461
      %v1463 = vpop.f32.mrf.mxu0
      %1464 = vdwg.mxu0
      %v1465 = vadd.f32 %v1330, %v1436
      %v1466 = vadd.f32 %v1331, %v1449
      %v1467 = vadd.f32 %v1332, %v1462
      %s1468 = scalar_lea.vmem %s4, 28
      %v1469 = vld [vmem:[%s1468] sm:$0xf]
      %1470 = vrot.lane.b32.xlu0 %v568, 89
      %v1471 = vpop.permute.xlu0 %1470
      %1472 = vrot.lane.b32.xlu0 %v569, 89
      %v1473 = vpop.permute.xlu0 %1472
      %1474 = vrot.lane.b32.xlu0 %v570, 89
      %v1475 = vpop.permute.xlu0 %1474
      %1476 = vrot.lane.b32.xlu0 %v571, 89
      %v1477 = vpop.permute.xlu0 %1476
      %vm1478 = vcmask 728064
      %v1479 = vsel %vm1478, %v1471, %v1473
      %v1480 = vsel %vm1478, %v1473, %v1475
      %v1481 = vsel %vm1478, %v1475, %v1477
      %v1483 = vsel %vm483, %v1469, 0
      %v1486 = vsel %vm487, %v1479, 0
      %v1489 = vsel %vm487, %v1480, 0
      %v1492 = vsel %vm487, %v1481, 0
      %1494 = vmatpush.bf16.msra.mxu0 0
      %1495 = vmatpush.bf16.msra.mxu0 0
      %1496 = vmatpush.bf16.msra.mxu0 0
      %1497 = vmatpush.bf16.msra.mxu0 0
      %1498 = vmatpush.bf16.msra.mxu0 0
      %1499 = vmatpush.bf16.msra.mxu0 0
      %1500 = vmatpush.bf16.msra.mxu0 0
      %1501 = vmatpush.bf16.msra.mxu0 %v1486
      %1502 = vmatmul.bf16.gmra.mxu0 %v1483
      %v1503 = vpop.f32.mrf.mxu0
      %v1504 = vadd.f32 0.0, %v1503
      %v1505 = vpop.f32.mrf.mxu0
      %1506 = vdwg.mxu0
      %1507 = vmatpush.bf16.msra.mxu0 0
      %1508 = vmatpush.bf16.msra.mxu0 0
      %1509 = vmatpush.bf16.msra.mxu0 0
      %1510 = vmatpush.bf16.msra.mxu0 0
      %1511 = vmatpush.bf16.msra.mxu0 0
      %1512 = vmatpush.bf16.msra.mxu0 0
      %1513 = vmatpush.bf16.msra.mxu0 0
      %1514 = vmatpush.bf16.msra.mxu0 %v1489
      %1515 = vmatmul.bf16.gmra.mxu0 %v1483
      %v1516 = vpop.f32.mrf.mxu0
      %v1517 = vadd.f32 0.0, %v1516
      %v1518 = vpop.f32.mrf.mxu0
      %1519 = vdwg.mxu0
      %1520 = vmatpush.bf16.msra.mxu0 0
      %1521 = vmatpush.bf16.msra.mxu0 0
      %1522 = vmatpush.bf16.msra.mxu0 0
      %1523 = vmatpush.bf16.msra.mxu0 0
      %1524 = vmatpush.bf16.msra.mxu0 0
      %1525 = vmatpush.bf16.msra.mxu0 0
      %1526 = vmatpush.bf16.msra.mxu0 0
      %1527 = vmatpush.bf16.msra.mxu0 %v1492
      %1528 = vmatmul.bf16.gmra.mxu0 %v1483
      %v1529 = vpop.f32.mrf.mxu0
      %v1530 = vadd.f32 0.0, %v1529
      %v1531 = vpop.f32.mrf.mxu0
      %1532 = vdwg.mxu0
      %v1533 = vadd.f32 %v1398, %v1504
      %v1534 = vadd.f32 %v1399, %v1517
      %v1535 = vadd.f32 %v1400, %v1530
      %s1536 = scalar_lea.vmem %s8, 28
      %v1537 = vld [vmem:[%s1536] sm:$0xf]
      %1538 = vrot.lane.b32.xlu0 %v473, 89
      %v1539 = vpop.permute.xlu0 %1538
      %1540 = vrot.lane.b32.xlu0 %v474, 89
      %v1541 = vpop.permute.xlu0 %1540
      %1542 = vrot.lane.b32.xlu0 %v475, 89
      %v1543 = vpop.permute.xlu0 %1542
      %1544 = vrot.lane.b32.xlu0 %v467, 89
      %v1545 = vpop.permute.xlu0 %1544
      %v1546 = vsel %vm1478, %v1539, %v1541
      %v1547 = vsel %vm1478, %v1541, %v1543
      %v1548 = vsel %vm1478, %v1543, %v1545
      %v1550 = vsel %vm483, %v1537, 0
      %v1553 = vsel %vm487, %v1546, 0
      %v1556 = vsel %vm487, %v1547, 0
      %v1559 = vsel %vm487, %v1548, 0
      %1561 = vmatpush.bf16.msra.mxu0 0
      %1562 = vmatpush.bf16.msra.mxu0 0
      %1563 = vmatpush.bf16.msra.mxu0 0
      %1564 = vmatpush.bf16.msra.mxu0 0
      %1565 = vmatpush.bf16.msra.mxu0 0
      %1566 = vmatpush.bf16.msra.mxu0 0
      %1567 = vmatpush.bf16.msra.mxu0 0
      %1568 = vmatpush.bf16.msra.mxu0 %v1553
      %1569 = vmatmul.bf16.gmra.mxu0 %v1550
      %v1570 = vpop.f32.mrf.mxu0
      %v1571 = vadd.f32 0.0, %v1570
      %v1572 = vpop.f32.mrf.mxu0
      %1573 = vdwg.mxu0
      %1574 = vmatpush.bf16.msra.mxu0 0
      %1575 = vmatpush.bf16.msra.mxu0 0
      %1576 = vmatpush.bf16.msra.mxu0 0
      %1577 = vmatpush.bf16.msra.mxu0 0
      %1578 = vmatpush.bf16.msra.mxu0 0
      %1579 = vmatpush.bf16.msra.mxu0 0
      %1580 = vmatpush.bf16.msra.mxu0 0
      %1581 = vmatpush.bf16.msra.mxu0 %v1556
      %1582 = vmatmul.bf16.gmra.mxu0 %v1550
      %v1583 = vpop.f32.mrf.mxu0
      %v1584 = vadd.f32 0.0, %v1583
      %v1585 = vpop.f32.mrf.mxu0
      %1586 = vdwg.mxu0
      %1587 = vmatpush.bf16.msra.mxu0 0
      %1588 = vmatpush.bf16.msra.mxu0 0
      %1589 = vmatpush.bf16.msra.mxu0 0
      %1590 = vmatpush.bf16.msra.mxu0 0
      %1591 = vmatpush.bf16.msra.mxu0 0
      %1592 = vmatpush.bf16.msra.mxu0 0
      %1593 = vmatpush.bf16.msra.mxu0 0
      %1594 = vmatpush.bf16.msra.mxu0 %v1559
      %1595 = vmatmul.bf16.gmra.mxu0 %v1550
      %v1596 = vpop.f32.mrf.mxu0
      %v1597 = vadd.f32 0.0, %v1596
      %v1598 = vpop.f32.mrf.mxu0
      %1599 = vdwg.mxu0
      %v1600 = vadd.f32 %v1465, %v1571
      %v1601 = vadd.f32 %v1466, %v1584
      %v1602 = vadd.f32 %v1467, %v1597
      %s1603 = scalar_lea.vmem %s4, 32
      %v1604 = vld [vmem:[%s1603] sm:$0xf]
      %1605 = vrot.lane.b32.xlu0 %v568, 88
      %v1606 = vpop.permute.xlu0 %1605
      %1607 = vrot.lane.b32.xlu0 %v569, 88
      %v1608 = vpop.permute.xlu0 %1607
      %1609 = vrot.lane.b32.xlu0 %v570, 88
      %v1610 = vpop.permute.xlu0 %1609
      %1611 = vrot.lane.b32.xlu0 %v571, 88
      %v1612 = vpop.permute.xlu0 %1611
      %vm1613 = vcmask 719872
      %v1614 = vsel %vm1613, %v1606, %v1608
      %v1615 = vsel %vm1613, %v1608, %v1610
      %v1616 = vsel %vm1613, %v1610, %v1612
      %v1618 = vsel %vm483, %v1604, 0
      %v1621 = vsel %vm487, %v1614, 0
      %v1624 = vsel %vm487, %v1615, 0
      %v1627 = vsel %vm487, %v1616, 0
      %1629 = vmatpush.bf16.msra.mxu0 0
      %1630 = vmatpush.bf16.msra.mxu0 0
      %1631 = vmatpush.bf16.msra.mxu0 0
      %1632 = vmatpush.bf16.msra.mxu0 0
      %1633 = vmatpush.bf16.msra.mxu0 0
      %1634 = vmatpush.bf16.msra.mxu0 0
      %1635 = vmatpush.bf16.msra.mxu0 0
      %1636 = vmatpush.bf16.msra.mxu0 %v1621
      %1637 = vmatmul.bf16.gmra.mxu0 %v1618
      %v1638 = vpop.f32.mrf.mxu0
      %v1639 = vadd.f32 0.0, %v1638
      %v1640 = vpop.f32.mrf.mxu0
      %1641 = vdwg.mxu0
      %1642 = vmatpush.bf16.msra.mxu0 0
      %1643 = vmatpush.bf16.msra.mxu0 0
      %1644 = vmatpush.bf16.msra.mxu0 0
      %1645 = vmatpush.bf16.msra.mxu0 0
      %1646 = vmatpush.bf16.msra.mxu0 0
      %1647 = vmatpush.bf16.msra.mxu0 0
      %1648 = vmatpush.bf16.msra.mxu0 0
      %1649 = vmatpush.bf16.msra.mxu0 %v1624
      %1650 = vmatmul.bf16.gmra.mxu0 %v1618
      %v1651 = vpop.f32.mrf.mxu0
      %v1652 = vadd.f32 0.0, %v1651
      %v1653 = vpop.f32.mrf.mxu0
      %1654 = vdwg.mxu0
      %1655 = vmatpush.bf16.msra.mxu0 0
      %1656 = vmatpush.bf16.msra.mxu0 0
      %1657 = vmatpush.bf16.msra.mxu0 0
      %1658 = vmatpush.bf16.msra.mxu0 0
      %1659 = vmatpush.bf16.msra.mxu0 0
      %1660 = vmatpush.bf16.msra.mxu0 0
      %1661 = vmatpush.bf16.msra.mxu0 0
      %1662 = vmatpush.bf16.msra.mxu0 %v1627
      %1663 = vmatmul.bf16.gmra.mxu0 %v1618
      %v1664 = vpop.f32.mrf.mxu0
      %v1665 = vadd.f32 0.0, %v1664
      %v1666 = vpop.f32.mrf.mxu0
      %1667 = vdwg.mxu0
      %v1668 = vadd.f32 %v1533, %v1639
      %v1669 = vadd.f32 %v1534, %v1652
      %v1670 = vadd.f32 %v1535, %v1665
      %s1671 = scalar_lea.vmem %s8, 32
      %v1672 = vld [vmem:[%s1671] sm:$0xf]
      %1673 = vrot.lane.b32.xlu0 %v473, 88
      %v1674 = vpop.permute.xlu0 %1673
      %1675 = vrot.lane.b32.xlu0 %v474, 88
      %v1676 = vpop.permute.xlu0 %1675
      %1677 = vrot.lane.b32.xlu0 %v475, 88
      %v1678 = vpop.permute.xlu0 %1677
      %1679 = vrot.lane.b32.xlu0 %v467, 88
      %v1680 = vpop.permute.xlu0 %1679
      %v1681 = vsel %vm1613, %v1674, %v1676
      %v1682 = vsel %vm1613, %v1676, %v1678
      %v1683 = vsel %vm1613, %v1678, %v1680
      %v1685 = vsel %vm483, %v1672, 0
      %v1688 = vsel %vm487, %v1681, 0
      %v1691 = vsel %vm487, %v1682, 0
      %v1694 = vsel %vm487, %v1683, 0
      %1696 = vmatpush.bf16.msra.mxu0 0
      %1697 = vmatpush.bf16.msra.mxu0 0
      %1698 = vmatpush.bf16.msra.mxu0 0
      %1699 = vmatpush.bf16.msra.mxu0 0
      %1700 = vmatpush.bf16.msra.mxu0 0
      %1701 = vmatpush.bf16.msra.mxu0 0
      %1702 = vmatpush.bf16.msra.mxu0 0
      %1703 = vmatpush.bf16.msra.mxu0 %v1688
      %1704 = vmatmul.bf16.gmra.mxu0 %v1685
      %v1705 = vpop.f32.mrf.mxu0
      %v1706 = vadd.f32 0.0, %v1705
      %v1707 = vpop.f32.mrf.mxu0
      %1708 = vdwg.mxu0
      %1709 = vmatpush.bf16.msra.mxu0 0
      %1710 = vmatpush.bf16.msra.mxu0 0
      %1711 = vmatpush.bf16.msra.mxu0 0
      %1712 = vmatpush.bf16.msra.mxu0 0
      %1713 = vmatpush.bf16.msra.mxu0 0
      %1714 = vmatpush.bf16.msra.mxu0 0
      %1715 = vmatpush.bf16.msra.mxu0 0
      %1716 = vmatpush.bf16.msra.mxu0 %v1691
      %1717 = vmatmul.bf16.gmra.mxu0 %v1685
      %v1718 = vpop.f32.mrf.mxu0
      %v1719 = vadd.f32 0.0, %v1718
      %v1720 = vpop.f32.mrf.mxu0
      %1721 = vdwg.mxu0
      %1722 = vmatpush.bf16.msra.mxu0 0
      %1723 = vmatpush.bf16.msra.mxu0 0
      %1724 = vmatpush.bf16.msra.mxu0 0
      %1725 = vmatpush.bf16.msra.mxu0 0
      %1726 = vmatpush.bf16.msra.mxu0 0
      %1727 = vmatpush.bf16.msra.mxu0 0
      %1728 = vmatpush.bf16.msra.mxu0 0
      %1729 = vmatpush.bf16.msra.mxu0 %v1694
      %1730 = vmatmul.bf16.gmra.mxu0 %v1685
      %v1731 = vpop.f32.mrf.mxu0
      %v1732 = vadd.f32 0.0, %v1731
      %v1733 = vpop.f32.mrf.mxu0
      %1734 = vdwg.mxu0
      %v1735 = vadd.f32 %v1600, %v1706
      %v1736 = vadd.f32 %v1601, %v1719
      %v1737 = vadd.f32 %v1602, %v1732
      %v1738 = vld [vmem:[%s5] sm:$0xff]
      %1740 = vset.pattern.permute.xlu0 0
      %1741 = vperm.xlu0 %1740, %v1738
      %v1742 = vpop.permute.xlu0 %1741
      %v1744 = vadd.f32 %v1668, %v1742
      %v1745 = vadd.f32 %v1669, %v1742
      %v1746 = vadd.f32 %v1670, %v1742
      %v1747 = vmax.f32 %v1744, 0.0
      %v1748 = vmax.f32 %v1745, 0.0
      %v1749 = vmax.f32 %v1746, 0.0
      %v1750 = vpack.c.bf16 %v1747, %v1747
      %v1751 = vpack.c.bf16 %v1748, %v1748
      %v1752 = vpack.c.bf16 %v1749, %v1749
      %v1753 = vld [vmem:[%s6] sm:$0xf]
      %v1754 = vld [vmem:[%s7] sm:$0xff]
      %1756 = vset.pattern.permute.xlu0 0
      %1757 = vperm.xlu0 %1756, %v1754
      %v1758 = vpop.permute.xlu0 %1757
      %v1761 = vsel %vm483, %v1753, 0
      %v1764 = vsel %vm487, %v1750, 0
      %v1767 = vsel %vm487, %v1751, 0
      %v1770 = vsel %vm487, %v1752, 0
      %1772 = vmatpush.bf16.msra.mxu0 0
      %1773 = vmatpush.bf16.msra.mxu0 0
      %1774 = vmatpush.bf16.msra.mxu0 0
      %1775 = vmatpush.bf16.msra.mxu0 0
      %1776 = vmatpush.bf16.msra.mxu0 0
      %1777 = vmatpush.bf16.msra.mxu0 0
      %1778 = vmatpush.bf16.msra.mxu0 0
      %1779 = vmatpush.bf16.msra.mxu0 %v1764
      %1780 = vmatmul.bf16.gmra.mxu0 %v1761
      %v1781 = vpop.f32.mrf.mxu0
      %v1782 = vadd.f32 %v1758, %v1781
      %v1783 = vpop.f32.mrf.mxu0
      %1784 = vdwg.mxu0
      %1785 = vmatpush.bf16.msra.mxu0 0
      %1786 = vmatpush.bf16.msra.mxu0 0
      %1787 = vmatpush.bf16.msra.mxu0 0
      %1788 = vmatpush.bf16.msra.mxu0 0
      %1789 = vmatpush.bf16.msra.mxu0 0
      %1790 = vmatpush.bf16.msra.mxu0 0
      %1791 = vmatpush.bf16.msra.mxu0 0
      %1792 = vmatpush.bf16.msra.mxu0 %v1767
      %1793 = vmatmul.bf16.gmra.mxu0 %v1761
      %v1794 = vpop.f32.mrf.mxu0
      %v1795 = vadd.f32 %v1758, %v1794
      %v1796 = vpop.f32.mrf.mxu0
      %1797 = vdwg.mxu0
      %1798 = vmatpush.bf16.msra.mxu0 0
      %1799 = vmatpush.bf16.msra.mxu0 0
      %1800 = vmatpush.bf16.msra.mxu0 0
      %1801 = vmatpush.bf16.msra.mxu0 0
      %1802 = vmatpush.bf16.msra.mxu0 0
      %1803 = vmatpush.bf16.msra.mxu0 0
      %1804 = vmatpush.bf16.msra.mxu0 0
      %1805 = vmatpush.bf16.msra.mxu0 %v1770
      %1806 = vmatmul.bf16.gmra.mxu0 %v1761
      %v1807 = vpop.f32.mrf.mxu0
      %v1808 = vadd.f32 %v1758, %v1807
      %v1809 = vpop.f32.mrf.mxu0
      %1810 = vdwg.mxu0
      %v1811 = vld [vmem:[%s9] sm:$0xff]
      %1813 = vset.pattern.permute.xlu0 0
      %1814 = vperm.xlu0 %1813, %v1811
      %v1815 = vpop.permute.xlu0 %1814
      %v1817 = vadd.f32 %v1735, %v1815
      %v1818 = vadd.f32 %v1736, %v1815
      %v1819 = vadd.f32 %v1737, %v1815
      %v1820 = vadd.f32 %v1782, %v1817
      %v1821 = vadd.f32 %v1795, %v1818
      %v1822 = vadd.f32 %v1808, %v1819
      %v1823 = vmax.f32 %v1820, 0.0
      %v1824 = vmax.f32 %v1821, 0.0
      %v1825 = vmax.f32 %v1822, 0.0
      %v1826 = vpack.c.bf16 %v1824, %v1823
      %v1827 = vpack.c.bf16 %v1825, %v1825
      %1828 = vst [vmem:[%s462] sm:$0xff] %v1826
      %1829 = vst [vmem:[%s462 + $0x8] sm:$0xf] %v1827
      %s1830 = smul.u32 3, %s26
      %p1831 = scmp.lt.s32.totalorder %s25, 1
      %s1832 = scalar_select %p1831, %s25, 1
      %p1833 = scmp.lt.s32.totalorder %s1830, 2
      %s1834 = scalar_select %p1833, %s1830, 2
      %s1835 = smul.addr %s1832, 3
      %s1836 = sadd.s32 %s1834, %s1835
      %s1837 = smul.addr %s1836, 4
      %s1838 = scalar_lea.vmem %s10, %s1837
      // Predicated region
      $region61: #{res_conv_critic_forward.1} parent=59 // pred_check
        %p1839 = pneg %p281
      $region62: #{res_conv_critic_forward.1} parent=59 // pred_check_branch
        %1841 = sbr.rel (%p1839) target = $region64
      $region63: #{res_conv_critic_forward.1} parent=59 // pred_region
        %s1842 = smul.u32 3, %s26
      $region64: #{res_conv_critic_forward.1} parent=59 // pred_fallthru
        _
    $region60: #{res_conv_critic_forward.1} parent=5 // pred_fallthru
      _
    %p1843 = scmp.le.s32.totalorder 2, %s16
    // Predicated region
    $region65: #{res_conv_critic_forward.1} parent=5 // pred_check
      %p1844 = pneg %p1843
    $region66: #{res_conv_critic_forward.1} parent=5 // pred_check_branch
      %1846 = sbr.rel (%p1844) target = $region68
    $region67: #{res_conv_critic_forward.1} parent=5 // pred_region
      %s1847 = ssub.s32 %s16, 2
      // Predicated region
      $region69: #{res_conv_critic_forward.1} parent=67 // pred_check
        %p1848 = pneg %p287
      $region70: #{res_conv_critic_forward.1} parent=67 // pred_check_branch
        %1850 = sbr.rel (%p1848) target = $region72
      $region71: #{res_conv_critic_forward.1} parent=67 // pred_region
        %s1851 = smul.u32 3, %s28
        %p1852 = scmp.lt.s32.totalorder %s27, 1
        %s1853 = scalar_select %p1852, %s27, 1
        %p1854 = scmp.lt.s32.totalorder %s1851, 2
        %s1855 = scalar_select %p1854, %s1851, 2
        %s1856 = smul.addr %s1853, 3
        %s1857 = sadd.s32 %s1855, %s1856
        %s1858 = smul.addr %s1857, 4
        %s1859 = scalar_lea.vmem %s10, %s1858
      $region72: #{res_conv_critic_forward.1} parent=67 // pred_fallthru
        _
    $region68: #{res_conv_critic_forward.1} parent=5 // pred_fallthru
      _
  $region6: #{res_conv_critic_forward.1} parent=0 // loop_footer
    %s20 = sadd.s32 1, %s16
  $region7: #{res_conv_critic_forward.1} parent=0 // loop_footer_branch
    %15 = sbr.rel target = $region3
  $region8: #{res_conv_critic_forward.1} parent=0 // loop_exit
    _

</llo_original>
